<compile_context>
chip_gen: v7x
topology: tpu7x:2x2x1
jax: 0.10.0
libtpu: 0.0.40
codegen_flags: <defaults>
</compile_context>

<pallas_src>
import functools

import jax
import jax.numpy as jnp
from jax.experimental import pallas as pl
from jax.experimental.pallas import tpu as pltpu


# ----------------------------- Pallas kernel --------------------------------
def widedeep_kernel(idx_ref, tbl_ref, w1_ref, b1_ref, w2_ref, b2_ref,
                    w3_ref, b3_ref, wfc_d_ref, out_ref):
    """One batch tile, batch on the lane axis.

    idx_ref   : (F, TILE_B) int32   global (offset) feature indices, streamed
    tbl_ref   : (E, TOTAL)  bf16    shared embedding table (transposed), resident
    w1_ref    : (129, F*E)  bf16    deep layer-1 weight with fc's embedding
                                    weight (wfc_e^T) appended as row 128
    b1_ref    : (129, 1)    f32     layer-1 bias with the fc bias in row 128
    w2_ref    : (64, 128) bf16, w3_ref : (32, 64) bf16
    b2_ref    : (64, 1) f32,    b3_ref : (32, 1) f32
    wfc_d_ref : (32, 1)     f32     fc weight over the deep output
    out_ref   : (1, TILE_B) f32     sigmoid output (lane-dense store)
    """
    f_dim, tile_b = idx_ref.shape
    e_dim, total = tbl_ref.shape
    d1 = w2_ref.shape[1]                 # 128 = true deep layer-1 width

    idx = idx_ref[...]                                          # (F, TILE_B) i32
    tbl = tbl_ref[...]                                          # (E, TOTAL) bf16
    rows = jax.lax.broadcasted_iota(jnp.int32, (total, tile_b), 0)

    # Fused embedding gather: per-field one-hot (exact 0/1 in bf16) x MXU.
    parts = []
    for f in range(f_dim):                                      # static unroll
        onehot = jnp.where(rows == idx[f:f + 1, :], 1.0, 0.0).astype(jnp.bfloat16)
        parts.append(jnp.dot(tbl, onehot, preferred_element_type=jnp.float32))
    emb_t = jnp.concatenate(parts, axis=0).astype(jnp.bfloat16)  # (F*E, TILE_B)

    # Deep layer 1 (bf16 MXU, f32 accumulate).  fc's embedding-part weight and
    # bias are folded in as output row d1, so the embedding half of the final
    # fc comes out of the same matmul (free on the 256-row MXU of v6e/v7x; on
    # v5e's 128-row MXU it costs one extra row pass).
    h = jnp.dot(w1_ref[...], emb_t, preferred_element_type=jnp.float32) + b1_ref[...]
    emb_logit = h[d1:d1 + 1, :]                                 # (1, TILE_B), pre-ReLU
    h = jnp.maximum(h[:d1, :], 0.0).astype(jnp.bfloat16)        # (128, TILE_B)

    # Deep layers 2 & 3 (BatchNorm1d / Dropout are eval-mode identity).
    h = jnp.dot(w2_ref[...], h, preferred_element_type=jnp.float32) + b2_ref[...]
    h = jnp.maximum(h, 0.0).astype(jnp.bfloat16)                # (64, TILE_B)
    h = jnp.dot(w3_ref[...], h, preferred_element_type=jnp.float32) + b3_ref[...]
    h = jnp.maximum(h, 0.0)                                     # (32, TILE_B) f32

    # fc deep part: an N=1 matmul would idle the MXU -> VPU multiply + sublane
    # reduction; result is already lane-dense (1, TILE_B).
    logits = emb_logit + jnp.sum(h * wfc_d_ref[...], axis=0, keepdims=True)

    # sigmoid: exp + approximate reciprocal, both on the otherwise-idle EUP.
    out_ref[...] = pl.reciprocal(1.0 + jnp.exp(-logits), approx=True)


def widedeep_pallas(idx_t, weights, tile_b):
    """idx_t: (F, B_pad) int32 with B_pad % tile_b == 0. Returns (1, B_pad) f32."""
    f_dim, b_pad = idx_t.shape
    num_tiles = b_pad // tile_b

    def resident(a):
        # full-array block + constant index_map -> DMA'd once, stays in VMEM.
        return pl.BlockSpec(a.shape, lambda i: (0, 0))

    return pl.pallas_call(
        widedeep_kernel,
        out_shape=jax.ShapeDtypeStruct((1, b_pad), jnp.float32),
        grid=(num_tiles,),
        in_specs=[pl.BlockSpec((f_dim, tile_b), lambda i: (0, i))]   # streamed idx
                 + [resident(w) for w in weights],                   # resident params
        out_specs=pl.BlockSpec((1, tile_b), lambda i: (0, i)),       # lane-dense out
        compiler_params=pltpu.CompilerParams(
            dimension_semantics=("parallel",),        # megacore sharding on v7x
            vmem_limit_bytes=64 * 1024 * 1024),       # explicit; <= v7x 64 MiB/TC
    )(idx_t, *weights)


# ------------------------------- glue / setup -------------------------------
def init_params(key, field_dims, embed_dim):
    num_fields = len(field_dims)
    total = int(sum(field_dims))
    in_dim = embed_dim * num_fields
    dims = [in_dim, 128, 64, 32]
    keys = jax.random.split(key, 12)

    def lin(k, fan_in, fan_out):
        # torch.nn.Linear weight layout: (out, in).  Synthetic small-scale init.
        return jax.random.normal(k, (fan_out, fan_in), jnp.float32) * 0.1

    def bias(k, n):
        return jax.random.normal(k, (n, 1), jnp.float32) * 0.1

    return {
        # shared offset-indexed embedding tables (FeaturesEmbedding)
        "wide_table": jax.random.normal(keys[0], (total, 1), jnp.float32) * 0.1,
        "emb_table":  jax.random.normal(keys[1], (total, embed_dim), jnp.float32) * 0.1,
        # deep MLP (biases stored as column vectors for the transposed kernel)
        "w1": lin(keys[2], dims[0], dims[1]), "b1": bias(keys[3], dims[1]),
        "w2": lin(keys[4], dims[1], dims[2]), "b2": bias(keys[5], dims[2]),
        "w3": lin(keys[6], dims[2], dims[3]), "b3": bias(keys[7], dims[3]),
        # final fc Linear(in_dim + 32, 1), split along the hstack concat
        "wfc_e": jax.random.normal(keys[8], (in_dim, 1), jnp.float32) * 0.1,
        "wfc_d": jax.random.normal(keys[9], (32, 1), jnp.float32) * 0.1,
        "bfc":   jax.random.normal(keys[10], (1, 1), jnp.float32) * 0.1,
    }


def pack_params(p):
    """Pack torch-layout f32 params into the kernel's resident (mostly bf16) layout."""
    w1p = jnp.concatenate([p["w1"], p["wfc_e"].T], axis=0)       # (129, F*E)
    b1p = jnp.concatenate([p["b1"], p["bfc"]], axis=0)           # (129, 1)
    return (
        p["emb_table"].T.astype(jnp.bfloat16),                   # (E, TOTAL)
        w1p.astype(jnp.bfloat16), b1p.astype(jnp.float32),
        p["w2"].astype(jnp.bfloat16), p["b2"].astype(jnp.float32),
        p["w3"].astype(jnp.bfloat16), p["b3"].astype(jnp.float32),
        p["wfc_d"].astype(jnp.float32),
    )


@functools.partial(jax.jit, static_argnames=("field_dims", "embed_dim", "tile_b"))
def widedeep_forward(x, params, field_dims, embed_dim, tile_b=16384):
    """x: (B, num_fields) int32 field indices.  Returns (B, 1) sigmoid outputs."""
    B, _ = x.shape
    offs = [0]
    for d in field_dims[:-1]:
        offs.append(offs[-1] + d)
    idx = (x + jnp.asarray(offs, jnp.int32)[None, :]).astype(jnp.int32)  # (B, F)

    # wide_output = self.wide(x) is computed by the PyTorch forward but never
    # used in the returned value; it is dead code and is omitted here.

    # Batch tile: as large as allowed, but keep >= 2 grid steps when B allows
    # so both v7x TensorCores get work; clamp to the 128-lane minimum.
    tile = max(128, min(tile_b, 128 * pl.cdiv(B, 256)))
    b_pad = tile * pl.cdiv(B, tile)

    # Only the tiny int32 indices are streamed (16 B / batch element); the
    # gather is fused into the kernel.  Padded columns select table row 0 and
    # are sliced away below.
    idx_t = jnp.pad(idx.T, ((0, 0), (0, b_pad - B)))                 # (F, B_pad)

    out_row = widedeep_pallas(idx_t, pack_params(params), tile)      # (1, B_pad)
    return out_row[0, :B, None]                                      # (B, 1)


# pure-JAX f32 reference for a sanity check
def widedeep_ref(x, p, field_dims):
    offs = [0]
    for d in field_dims[:-1]:
        offs.append(offs[-1] + d)
    idx = x + jnp.asarray(offs, jnp.int32)[None, :]
    emb = jnp.take(p["emb_table"], idx, axis=0).reshape(x.shape[0], -1)
    hp = jax.lax.Precision.HIGHEST
    h = jnp.maximum(jnp.dot(emb, p["w1"].T, precision=hp) + p["b1"][:, 0], 0.0)
    h = jnp.maximum(jnp.dot(h, p["w2"].T, precision=hp) + p["b2"][:, 0], 0.0)
    h = jnp.maximum(jnp.dot(h, p["w3"].T, precision=hp) + p["b3"][:, 0], 0.0)
    logits = (jnp.dot(emb, p["wfc_e"], precision=hp)
              + jnp.dot(h, p["wfc_d"], precision=hp) + p["bfc"][0])
    return jax.nn.sigmoid(logits)


if __name__ == "__main__":
    field_dims = (10, 20, 30, 40)    # 4 fields, 100 total rows in the shared table
    embed_dim = 4
    batch = 200                       # not a tile multiple: exercises padding + 2-step grid

    key = jax.random.PRNGKey(0)
    k_param, k_x = jax.random.split(key)
    params = init_params(k_param, field_dims, embed_dim)

    # deterministic integer feature indices, each field index < its field_dim
    maxes = jnp.asarray(field_dims, jnp.int32)[None, :]
    x = (jax.random.randint(k_x, (batch, len(field_dims)), 0, 10 ** 6) % maxes).astype(jnp.int32)

    out = widedeep_forward(x, params, field_dims, embed_dim)
    out = jax.block_until_ready(out)
    assert out.shape == (batch, 1)

    # correctness check against the f32 reference (loosened for the bf16 MXU
    # path + approximate-reciprocal sigmoid)
    ref = widedeep_ref(x, params, field_dims)
    err = float(jnp.max(jnp.abs(out - ref)))
    assert err < 2e-2, f"max abs err {err}"

    print("KERNEL_OK")
</pallas_src>

<mosaic_0001>
module attributes {stable_mosaic.version = 11 : i64} {
  func.func @widedeep_kernel(%arg0: i32, %arg1: memref<4x128xi32, #tpu.memory_space<vmem>>, %arg2: memref<4x100xbf16, #tpu.memory_space<vmem>>, %arg3: memref<129x16xbf16, #tpu.memory_space<vmem>>, %arg4: memref<129x1xf32, #tpu.memory_space<vmem>>, %arg5: memref<64x128xbf16, #tpu.memory_space<vmem>>, %arg6: memref<64x1xf32, #tpu.memory_space<vmem>>, %arg7: memref<32x64xbf16, #tpu.memory_space<vmem>>, %arg8: memref<32x1xf32, #tpu.memory_space<vmem>>, %arg9: memref<32x1xf32, #tpu.memory_space<vmem>>, %arg10: memref<1x128xf32, #tpu.memory_space<vmem>>) attributes {dimension_semantics = [#tpu.dimension_semantics<parallel>], iteration_bounds = array<i64: 2>, scalar_prefetch = 0 : i64, scratch_operands = 0 : i64, tpu.core_type = #tpu.core_type<tc>, window_params = [{transform_indices = @transform_0, window_bounds = array<i64: 4, 128>}, {pipeline_mode = #tpu.pipeline_mode<synchronous>, transform_indices = @transform_1, window_bounds = array<i64: 4, 100>}, {pipeline_mode = #tpu.pipeline_mode<synchronous>, transform_indices = @transform_2, window_bounds = array<i64: 129, 16>}, {pipeline_mode = #tpu.pipeline_mode<synchronous>, transform_indices = @transform_3, window_bounds = array<i64: 129, 1>}, {pipeline_mode = #tpu.pipeline_mode<synchronous>, transform_indices = @transform_4, window_bounds = array<i64: 64, 128>}, {pipeline_mode = #tpu.pipeline_mode<synchronous>, transform_indices = @transform_5, window_bounds = array<i64: 64, 1>}, {pipeline_mode = #tpu.pipeline_mode<synchronous>, transform_indices = @transform_6, window_bounds = array<i64: 32, 64>}, {pipeline_mode = #tpu.pipeline_mode<synchronous>, transform_indices = @transform_7, window_bounds = array<i64: 32, 1>}, {pipeline_mode = #tpu.pipeline_mode<synchronous>, transform_indices = @transform_8, window_bounds = array<i64: 32, 1>}, {transform_indices = @transform_9, window_bounds = array<i64: 1, 128>}]} {
    %c0 = arith.constant 0 : index
    %c0_0 = arith.constant 0 : index
    %0 = vector.load %arg1[%c0, %c0_0] : memref<4x128xi32, #tpu.memory_space<vmem>>, vector<4x128xi32>
    %c0_1 = arith.constant 0 : index
    %c0_2 = arith.constant 0 : index
    %1 = vector.load %arg2[%c0_1, %c0_2] : memref<4x100xbf16, #tpu.memory_space<vmem>>, vector<4x100xbf16>
    %2 = tpu.iota {dimensions = array<i32: 0>} : vector<100x128xi32>
    %3 = vector.extract_strided_slice %0 {offsets = [0, 0], sizes = [1, 128], strides = [1, 1]} : vector<4x128xi32> to vector<1x128xi32>
    %4 = vector.broadcast %3 : vector<1x128xi32> to vector<100x128xi32>
    %5 = arith.cmpi eq, %2, %4 : vector<100x128xi32>
    %cst = arith.constant 1.000000e+00 : f32
    %cst_3 = arith.constant 0.000000e+00 : f32
    %6 = vector.broadcast %cst : f32 to vector<100x128xf32>
    %7 = vector.broadcast %cst_3 : f32 to vector<100x128xf32>
    %8 = arith.select %5, %6, %7 : vector<100x128xi1>, vector<100x128xf32>
    %9 = arith.truncf %8 : vector<100x128xf32> to vector<100x128xbf16>
    %cst_4 = arith.constant dense<0.000000e+00> : vector<4x128xf32>
    %10 = tpu.matmul %1, %9, %cst_4 {dimension_numbers = #tpu.dot_dimension_numbers<[1], [0], [0], [1], [0, 0, 1, 1], [], []>} : vector<4x100xbf16>, vector<100x128xbf16>, vector<4x128xf32> -> vector<4x128xf32>
    %11 = vector.extract_strided_slice %0 {offsets = [1, 0], sizes = [1, 128], strides = [1, 1]} : vector<4x128xi32> to vector<1x128xi32>
    %12 = vector.broadcast %11 : vector<1x128xi32> to vector<100x128xi32>
    %13 = arith.cmpi eq, %2, %12 : vector<100x128xi32>
    %cst_5 = arith.constant 1.000000e+00 : f32
    %cst_6 = arith.constant 0.000000e+00 : f32
    %14 = vector.broadcast %cst_5 : f32 to vector<100x128xf32>
    %15 = vector.broadcast %cst_6 : f32 to vector<100x128xf32>
    %16 = arith.select %13, %14, %15 : vector<100x128xi1>, vector<100x128xf32>
    %17 = arith.truncf %16 : vector<100x128xf32> to vector<100x128xbf16>
    %cst_7 = arith.constant dense<0.000000e+00> : vector<4x128xf32>
    %18 = tpu.matmul %1, %17, %cst_7 {dimension_numbers = #tpu.dot_dimension_numbers<[1], [0], [0], [1], [0, 0, 1, 1], [], []>} : vector<4x100xbf16>, vector<100x128xbf16>, vector<4x128xf32> -> vector<4x128xf32>
    %19 = vector.extract_strided_slice %0 {offsets = [2, 0], sizes = [1, 128], strides = [1, 1]} : vector<4x128xi32> to vector<1x128xi32>
    %20 = vector.broadcast %19 : vector<1x128xi32> to vector<100x128xi32>
    %21 = arith.cmpi eq, %2, %20 : vector<100x128xi32>
    %cst_8 = arith.constant 1.000000e+00 : f32
    %cst_9 = arith.constant 0.000000e+00 : f32
    %22 = vector.broadcast %cst_8 : f32 to vector<100x128xf32>
    %23 = vector.broadcast %cst_9 : f32 to vector<100x128xf32>
    %24 = arith.select %21, %22, %23 : vector<100x128xi1>, vector<100x128xf32>
    %25 = arith.truncf %24 : vector<100x128xf32> to vector<100x128xbf16>
    %cst_10 = arith.constant dense<0.000000e+00> : vector<4x128xf32>
    %26 = tpu.matmul %1, %25, %cst_10 {dimension_numbers = #tpu.dot_dimension_numbers<[1], [0], [0], [1], [0, 0, 1, 1], [], []>} : vector<4x100xbf16>, vector<100x128xbf16>, vector<4x128xf32> -> vector<4x128xf32>
    %27 = vector.extract_strided_slice %0 {offsets = [3, 0], sizes = [1, 128], strides = [1, 1]} : vector<4x128xi32> to vector<1x128xi32>
    %28 = vector.broadcast %27 : vector<1x128xi32> to vector<100x128xi32>
    %29 = arith.cmpi eq, %2, %28 : vector<100x128xi32>
    %cst_11 = arith.constant 1.000000e+00 : f32
    %cst_12 = arith.constant 0.000000e+00 : f32
    %30 = vector.broadcast %cst_11 : f32 to vector<100x128xf32>
    %31 = vector.broadcast %cst_12 : f32 to vector<100x128xf32>
    %32 = arith.select %29, %30, %31 : vector<100x128xi1>, vector<100x128xf32>
    %33 = arith.truncf %32 : vector<100x128xf32> to vector<100x128xbf16>
    %cst_13 = arith.constant dense<0.000000e+00> : vector<4x128xf32>
    %34 = tpu.matmul %1, %33, %cst_13 {dimension_numbers = #tpu.dot_dimension_numbers<[1], [0], [0], [1], [0, 0, 1, 1], [], []>} : vector<4x100xbf16>, vector<100x128xbf16>, vector<4x128xf32> -> vector<4x128xf32>
    %35 = tpu.concatenate %10, %18, %26, %34 in 0 : vector<4x128xf32>, vector<4x128xf32>, vector<4x128xf32>, vector<4x128xf32> -> vector<16x128xf32>
    %36 = arith.truncf %35 : vector<16x128xf32> to vector<16x128xbf16>
    %c0_14 = arith.constant 0 : index
    %c0_15 = arith.constant 0 : index
    %37 = vector.load %arg3[%c0_14, %c0_15] : memref<129x16xbf16, #tpu.memory_space<vmem>>, vector<129x16xbf16>
    %cst_16 = arith.constant dense<0.000000e+00> : vector<129x128xf32>
    %38 = tpu.matmul %37, %36, %cst_16 {dimension_numbers = #tpu.dot_dimension_numbers<[1], [0], [0], [1], [0, 0, 1, 1], [], []>} : vector<129x16xbf16>, vector<16x128xbf16>, vector<129x128xf32> -> vector<129x128xf32>
    %c0_17 = arith.constant 0 : index
    %c0_18 = arith.constant 0 : index
    %39 = vector.load %arg4[%c0_17, %c0_18] : memref<129x1xf32, #tpu.memory_space<vmem>>, vector<129x1xf32>
    %40 = vector.broadcast %39 : vector<129x1xf32> to vector<129x128xf32>
    %41 = arith.addf %38, %40 : vector<129x128xf32>
    %42 = vector.extract_strided_slice %41 {offsets = [128, 0], sizes = [1, 128], strides = [1, 1]} : vector<129x128xf32> to vector<1x128xf32>
    %43 = vector.extract_strided_slice %41 {offsets = [0, 0], sizes = [128, 128], strides = [1, 1]} : vector<129x128xf32> to vector<128x128xf32>
    %cst_19 = arith.constant 0.000000e+00 : f32
    %44 = vector.broadcast %cst_19 : f32 to vector<128x128xf32>
    %45 = arith.maximumf %43, %44 : vector<128x128xf32>
    %46 = arith.truncf %45 : vector<128x128xf32> to vector<128x128xbf16>
    %c0_20 = arith.constant 0 : index
    %c0_21 = arith.constant 0 : index
    %47 = vector.load %arg5[%c0_20, %c0_21] : memref<64x128xbf16, #tpu.memory_space<vmem>>, vector<64x128xbf16>
    %cst_22 = arith.constant dense<0.000000e+00> : vector<64x128xf32>
    %48 = tpu.matmul %47, %46, %cst_22 {dimension_numbers = #tpu.dot_dimension_numbers<[1], [0], [0], [1], [0, 0, 1, 1], [], []>} : vector<64x128xbf16>, vector<128x128xbf16>, vector<64x128xf32> -> vector<64x128xf32>
    %c0_23 = arith.constant 0 : index
    %c0_24 = arith.constant 0 : index
    %49 = vector.load %arg6[%c0_23, %c0_24] : memref<64x1xf32, #tpu.memory_space<vmem>>, vector<64x1xf32>
    %50 = vector.broadcast %49 : vector<64x1xf32> to vector<64x128xf32>
    %51 = arith.addf %48, %50 : vector<64x128xf32>
    %cst_25 = arith.constant 0.000000e+00 : f32
    %52 = vector.broadcast %cst_25 : f32 to vector<64x128xf32>
    %53 = arith.maximumf %51, %52 : vector<64x128xf32>
    %54 = arith.truncf %53 : vector<64x128xf32> to vector<64x128xbf16>
    %c0_26 = arith.constant 0 : index
    %c0_27 = arith.constant 0 : index
    %55 = vector.load %arg7[%c0_26, %c0_27] : memref<32x64xbf16, #tpu.memory_space<vmem>>, vector<32x64xbf16>
    %cst_28 = arith.constant dense<0.000000e+00> : vector<32x128xf32>
    %56 = tpu.matmul %55, %54, %cst_28 {dimension_numbers = #tpu.dot_dimension_numbers<[1], [0], [0], [1], [0, 0, 1, 1], [], []>} : vector<32x64xbf16>, vector<64x128xbf16>, vector<32x128xf32> -> vector<32x128xf32>
    %c0_29 = arith.constant 0 : index
    %c0_30 = arith.constant 0 : index
    %57 = vector.load %arg8[%c0_29, %c0_30] : memref<32x1xf32, #tpu.memory_space<vmem>>, vector<32x1xf32>
    %58 = vector.broadcast %57 : vector<32x1xf32> to vector<32x128xf32>
    %59 = arith.addf %56, %58 : vector<32x128xf32>
    %cst_31 = arith.constant 0.000000e+00 : f32
    %60 = vector.broadcast %cst_31 : f32 to vector<32x128xf32>
    %61 = arith.maximumf %59, %60 : vector<32x128xf32>
    %c0_32 = arith.constant 0 : index
    %c0_33 = arith.constant 0 : index
    %62 = vector.load %arg9[%c0_32, %c0_33] : memref<32x1xf32, #tpu.memory_space<vmem>>, vector<32x1xf32>
    %63 = vector.broadcast %62 : vector<32x1xf32> to vector<32x128xf32>
    %64 = arith.mulf %61, %63 : vector<32x128xf32>
    %cst_34 = arith.constant dense<0.000000e+00> : vector<128xf32>
    %65 = vector.multi_reduction <add>, %64, %cst_34 [0] : vector<32x128xf32> to vector<128xf32>
    %66 = vector.shape_cast %65 : vector<128xf32> to vector<1x128xf32>
    %67 = arith.addf %42, %66 : vector<1x128xf32>
    %cst_35 = arith.constant 0.000000e+00 : f32
    %68 = vector.broadcast %cst_35 : f32 to vector<1x128xf32>
    %69 = arith.subf %68, %67 : vector<1x128xf32>
    %70 = math.exp %69 : vector<1x128xf32>
    %cst_36 = arith.constant 1.000000e+00 : f32
    %71 = vector.broadcast %cst_36 : f32 to vector<1x128xf32>
    %72 = arith.addf %71, %70 : vector<1x128xf32>
    %73 = tpu.reciprocal %72 {approx = true} : vector<1x128xf32> -> vector<1x128xf32>
    %c0_37 = arith.constant 0 : index
    %c0_38 = arith.constant 0 : index
    %74 = vector.load %arg10[%c0_37, %c0_38] : memref<1x128xf32, #tpu.memory_space<vmem>>, vector<1x128xf32>
    tpu.vector_store %arg10[%c0_37, %c0_38], %73 {strides = array<i32>} : memref<1x128xf32, #tpu.memory_space<vmem>>, vector<1x128xf32>,
    return
  }
  func.func @transform_0(%arg0: i32) -> (i32, i32) {
    %c0_i32 = arith.constant 0 : i32
    %c0_i32_0 = arith.constant 0 : i32
    return %c0_i32, %arg0 : i32, i32
  }
  func.func @transform_1(%arg0: i32) -> (i32, i32) {
    %c0_i32 = arith.constant 0 : i32
    %c0_i32_0 = arith.constant 0 : i32
    %c0_i32_1 = arith.constant 0 : i32
    return %c0_i32, %c0_i32_0 : i32, i32
  }
  func.func @transform_2(%arg0: i32) -> (i32, i32) {
    %c0_i32 = arith.constant 0 : i32
    %c0_i32_0 = arith.constant 0 : i32
    %c0_i32_1 = arith.constant 0 : i32
    return %c0_i32, %c0_i32_0 : i32, i32
  }
  func.func @transform_3(%arg0: i32) -> (i32, i32) {
    %c0_i32 = arith.constant 0 : i32
    %c0_i32_0 = arith.constant 0 : i32
    %c0_i32_1 = arith.constant 0 : i32
    return %c0_i32, %c0_i32_0 : i32, i32
  }
  func.func @transform_4(%arg0: i32) -> (i32, i32) {
    %c0_i32 = arith.constant 0 : i32
    %c0_i32_0 = arith.constant 0 : i32
    %c0_i32_1 = arith.constant 0 : i32
    return %c0_i32, %c0_i32_0 : i32, i32
  }
  func.func @transform_5(%arg0: i32) -> (i32, i32) {
    %c0_i32 = arith.constant 0 : i32
    %c0_i32_0 = arith.constant 0 : i32
    %c0_i32_1 = arith.constant 0 : i32
    return %c0_i32, %c0_i32_0 : i32, i32
  }
  func.func @transform_6(%arg0: i32) -> (i32, i32) {
    %c0_i32 = arith.constant 0 : i32
    %c0_i32_0 = arith.constant 0 : i32
    %c0_i32_1 = arith.constant 0 : i32
    return %c0_i32, %c0_i32_0 : i32, i32
  }
  func.func @transform_7(%arg0: i32) -> (i32, i32) {
    %c0_i32 = arith.constant 0 : i32
    %c0_i32_0 = arith.constant 0 : i32
    %c0_i32_1 = arith.constant 0 : i32
    return %c0_i32, %c0_i32_0 : i32, i32
  }
  func.func @transform_8(%arg0: i32) -> (i32, i32) {
    %c0_i32 = arith.constant 0 : i32
    %c0_i32_0 = arith.constant 0 : i32
    %c0_i32_1 = arith.constant 0 : i32
    return %c0_i32, %c0_i32_0 : i32, i32
  }
  func.func @transform_9(%arg0: i32) -> (i32, i32) {
    %c0_i32 = arith.constant 0 : i32
    %c0_i32_0 = arith.constant 0 : i32
    return %c0_i32, %arg0 : i32, i32
  }
}

</mosaic_0001>

<llo_original>
// kernel: widedeep_forward.1
$region0: #{widedeep_forward.1}
  #allocation0 [shape = 'u32[]', space=smem, size = 0x4, offset = 0x4, fixed_abs, tag = 'smem constant byte address 0x4 - core index']
  #allocation1 [shape = 'u32[144,128]{1,0:T(1,128)}', space=vmem, size = 0x12000, scoped, tag = 'internal scratch']
  %s0 = inlined_call_operand.hbm [shape: s32[4,256], index: 0, kind: input, shape index: {}]
  %s1 = inlined_call_operand.hbm [shape: bf16[4,100], index: 1, kind: input, shape index: {}]
  %s2 = inlined_call_operand.hbm [shape: bf16[129,16], index: 2, kind: input, shape index: {}]
  %s3 = inlined_call_operand.hbm [shape: f32[129,1], index: 3, kind: input, shape index: {}]
  %s4 = inlined_call_operand.hbm [shape: bf16[64,128], index: 4, kind: input, shape index: {}]
  %s5 = inlined_call_operand.hbm [shape: f32[64,1], index: 5, kind: input, shape index: {}]
  %s6 = inlined_call_operand.hbm [shape: bf16[32,64], index: 6, kind: input, shape index: {}]
  %s7 = inlined_call_operand.hbm [shape: f32[32,1], index: 7, kind: input, shape index: {}]
  %s8 = inlined_call_operand.hbm [shape: f32[32,1], index: 8, kind: input, shape index: {}]
  %s9 = inlined_call_operand.hbm [shape: f32[1,256], index: 9, kind: output, shape index: {}]
  %s10 = sld [smem:[#allocation0]]
  $region105: #{widedeep_forward.1} parent=0
    _
  %s12 = ssub.s32 1, %s10
  %s13 = scalar_select 0, %s12, %s10
  $region1: #{widedeep_forward.1} parent=0
    #allocation2 [shape = 'u8[4096]{0}', space=vmem, size = 0x1000, scoped, tag = 'input window, operand 0']
    #allocation3 [shape = 's32[2]{0}', space=sflag, size = 0x8, scoped, tag = 'scoped memory for widedeep_forward.1']
    #allocation4 [shape = 's32[2]{0}', space=sflag, size = 0x8, scoped, tag = 'scoped memory for widedeep_forward.1']
    #allocation5 [shape = 'u8[1024]{0}', space=vmem, size = 0x400, scoped, tag = 'input window, operand 1, single buffered']
    #allocation6 [shape = 's32[1]{0}', space=sflag, size = 0x4, scoped, tag = 'scoped memory for widedeep_forward.1']
    #allocation7 [shape = 'u8[34816]{0}', space=vmem, size = 0x8800, scoped, tag = 'input window, operand 2, single buffered']
    #allocation8 [shape = 'u8[69632]{0}', space=vmem, size = 0x11000, scoped, tag = 'input window, operand 3, single buffered']
    #allocation9 [shape = 's32[1]{0}', space=sflag, size = 0x4, scoped, tag = 'scoped memory for widedeep_forward.1']
    #allocation10 [shape = 'u8[16384]{0}', space=vmem, size = 0x4000, scoped, tag = 'input window, operand 4, single buffered']
    #allocation11 [shape = 'u8[32768]{0}', space=vmem, size = 0x8000, scoped, tag = 'input window, operand 5, single buffered']
    #allocation12 [shape = 's32[1]{0}', space=sflag, size = 0x4, scoped, tag = 'scoped memory for widedeep_forward.1']
    #allocation13 [shape = 'u8[8192]{0}', space=vmem, size = 0x2000, scoped, tag = 'input window, operand 6, single buffered']
    #allocation14 [shape = 'u8[16384]{0}', space=vmem, size = 0x4000, scoped, tag = 'input window, operand 7, single buffered']
    #allocation15 [shape = 's32[1]{0}', space=sflag, size = 0x4, scoped, tag = 'scoped memory for widedeep_forward.1']
    #allocation16 [shape = 'u8[16384]{0}', space=vmem, size = 0x4000, scoped, tag = 'input window, operand 8, single buffered']
    #allocation17 [shape = 'u8[1024]{0}', space=vmem, size = 0x400, scoped, tag = 'output window, operand 0']
    %14 = vsyncpa [#allocation3], 0
    %s15 = scalar_lea.sflag [#allocation3], 1
    %16 = vsyncpa %s15, 0
    %17 = vsyncpa [#allocation6], 0
    %18 = vsyncpa [#allocation9], 0
    %19 = vsyncpa [#allocation12], 0
    %20 = vsyncpa [#allocation15], 0
    %21 = vsyncpa [#allocation4], 0
    %s22 = scalar_lea.sflag [#allocation4], 1
    %23 = vsyncpa %s22, 0
    loop: start=0, step=1, limit=4
    $region2: #{widedeep_forward.1} parent=1 // loop_pre_header
      _
    $region3: #{widedeep_forward.1} parent=1 // loop_header
      %s25 = sphi 0, %s29
      %p26 = scmp.ge.s32.totalorder %s25, 4
      %s35 = sphi 0, %s37
      %s38 = sphi 0, %s35
      %s39 = sphi 0, %s38
      %s55 = sphi 0, %s39
      %s59 = sphi 0, %s59
      %s61 = sphi 0, %s59
      %s62 = sphi 0, %s61
      %s76 = sphi 0, %s62
      %s80 = sphi 0, %s80
      %s82 = sphi 0, %s80
      %s83 = sphi 0, %s82
      %s97 = sphi 0, %s83
      %s101 = sphi 0, %s101
      %s103 = sphi 0, %s101
      %s104 = sphi 0, %s103
      %s118 = sphi 0, %s104
      %s122 = sphi 0, %s122
      %s124 = sphi 0, %s122
      %s125 = sphi 0, %s124
      %s139 = sphi 0, %s125
      %s143 = sphi 0, %s143
      %s145 = sphi 0, %s143
      %s146 = sphi 0, %s145
      %s160 = sphi 0, %s146
      %s164 = sphi 0, %s164
      %s166 = sphi 0, %s164
      %s167 = sphi 0, %s166
      %s181 = sphi 0, %s167
      %s185 = sphi 0, %s185
      %s187 = sphi 0, %s185
      %s188 = sphi 0, %s187
      %s202 = sphi 0, %s188
      %s206 = sphi 0, %s206
      %s208 = sphi 0, %s206
      %s209 = sphi 0, %s208
      %s223 = sphi 0, %s209
      %s229 = sphi 0, %s231
      %s232 = sphi 0, %s229
      %s233 = sphi 0, %s232
      %s249 = sphi 0, %s233
    $region4: #{widedeep_forward.1} parent=1 // loop_header_branch
      %28 = sbr.rel (%p26) target = $region8
    $region5: #{widedeep_forward.1} parent=1 // loop_body
      %s30 = ssub.s32 %s25, 1
      %s31 = ssub.s32 %s25, 2
      %s32 = sadd.s32 %s25, 1
      %s33 = ssub.s32 %s25, %s32
      %p34 = scmp.eq.s32.totalorder %s33, 0
      %s36 = sadd.s32 %s35, 1
      %s37 = scalar_select %p34, %s35, %s36
      %p40 = pneg %p34
      %p41 = scmp.eq.s32.totalorder %s25, 1
      %p42 = por %p40, %p41
      %p43 = scmp.ne.s32.totalorder %s35, %s38
      %p44 = scmp.eq.s32.totalorder %s25, 0
      %p45 = por %p43, %p44
      %p46 = scmp.ne.s32.totalorder %s35, %s38
      %p47 = scmp.eq.s32.totalorder %s30, 1
      %p48 = por %p46, %p47
      %p49 = scmp.ne.s32.totalorder %s38, %s39
      %p50 = scmp.eq.s32.totalorder %s30, 0
      %p51 = por %p49, %p50
      %p52 = scmp.ne.s32.totalorder %s38, %s39
      %p53 = scmp.eq.s32.totalorder %s31, 1
      %p54 = por %p52, %p53
      %p56 = scmp.ne.s32.totalorder %s39, %s55
      %p57 = scmp.eq.s32.totalorder %s31, 0
      %p58 = por %p56, %p57
      %s60 = sadd.s32 %s59, 1
      %p63 = scmp.eq.s32.totalorder %s25, 1
      %p64 = scmp.ne.s32.totalorder %s59, %s61
      %p65 = scmp.eq.s32.totalorder %s25, 0
      %p66 = por %p64, %p65
      %p67 = scmp.ne.s32.totalorder %s59, %s61
      %p68 = scmp.eq.s32.totalorder %s30, 1
      %p69 = por %p67, %p68
      %p70 = scmp.ne.s32.totalorder %s61, %s62
      %p71 = scmp.eq.s32.totalorder %s30, 0
      %p72 = por %p70, %p71
      %p73 = scmp.ne.s32.totalorder %s61, %s62
      %p74 = scmp.eq.s32.totalorder %s31, 1
      %p75 = por %p73, %p74
      %p77 = scmp.ne.s32.totalorder %s62, %s76
      %p78 = scmp.eq.s32.totalorder %s31, 0
      %p79 = por %p77, %p78
      %s81 = sadd.s32 %s80, 1
      %p84 = scmp.eq.s32.totalorder %s25, 1
      %p85 = scmp.ne.s32.totalorder %s80, %s82
      %p86 = scmp.eq.s32.totalorder %s25, 0
      %p87 = por %p85, %p86
      %p88 = scmp.ne.s32.totalorder %s80, %s82
      %p89 = scmp.eq.s32.totalorder %s30, 1
      %p90 = por %p88, %p89
      %p91 = scmp.ne.s32.totalorder %s82, %s83
      %p92 = scmp.eq.s32.totalorder %s30, 0
      %p93 = por %p91, %p92
      %p94 = scmp.ne.s32.totalorder %s82, %s83
      %p95 = scmp.eq.s32.totalorder %s31, 1
      %p96 = por %p94, %p95
      %p98 = scmp.ne.s32.totalorder %s83, %s97
      %p99 = scmp.eq.s32.totalorder %s31, 0
      %p100 = por %p98, %p99
      %s102 = sadd.s32 %s101, 1
      %p105 = scmp.eq.s32.totalorder %s25, 1
      %p106 = scmp.ne.s32.totalorder %s101, %s103
      %p107 = scmp.eq.s32.totalorder %s25, 0
      %p108 = por %p106, %p107
      %p109 = scmp.ne.s32.totalorder %s101, %s103
      %p110 = scmp.eq.s32.totalorder %s30, 1
      %p111 = por %p109, %p110
      %p112 = scmp.ne.s32.totalorder %s103, %s104
      %p113 = scmp.eq.s32.totalorder %s30, 0
      %p114 = por %p112, %p113
      %p115 = scmp.ne.s32.totalorder %s103, %s104
      %p116 = scmp.eq.s32.totalorder %s31, 1
      %p117 = por %p115, %p116
      %p119 = scmp.ne.s32.totalorder %s104, %s118
      %p120 = scmp.eq.s32.totalorder %s31, 0
      %p121 = por %p119, %p120
      %s123 = sadd.s32 %s122, 1
      %p126 = scmp.eq.s32.totalorder %s25, 1
      %p127 = scmp.ne.s32.totalorder %s122, %s124
      %p128 = scmp.eq.s32.totalorder %s25, 0
      %p129 = por %p127, %p128
      %p130 = scmp.ne.s32.totalorder %s122, %s124
      %p131 = scmp.eq.s32.totalorder %s30, 1
      %p132 = por %p130, %p131
      %p133 = scmp.ne.s32.totalorder %s124, %s125
      %p134 = scmp.eq.s32.totalorder %s30, 0
      %p135 = por %p133, %p134
      %p136 = scmp.ne.s32.totalorder %s124, %s125
      %p137 = scmp.eq.s32.totalorder %s31, 1
      %p138 = por %p136, %p137
      %p140 = scmp.ne.s32.totalorder %s125, %s139
      %p141 = scmp.eq.s32.totalorder %s31, 0
      %p142 = por %p140, %p141
      %s144 = sadd.s32 %s143, 1
      %p147 = scmp.eq.s32.totalorder %s25, 1
      %p148 = scmp.ne.s32.totalorder %s143, %s145
      %p149 = scmp.eq.s32.totalorder %s25, 0
      %p150 = por %p148, %p149
      %p151 = scmp.ne.s32.totalorder %s143, %s145
      %p152 = scmp.eq.s32.totalorder %s30, 1
      %p153 = por %p151, %p152
      %p154 = scmp.ne.s32.totalorder %s145, %s146
      %p155 = scmp.eq.s32.totalorder %s30, 0
      %p156 = por %p154, %p155
      %p157 = scmp.ne.s32.totalorder %s145, %s146
      %p158 = scmp.eq.s32.totalorder %s31, 1
      %p159 = por %p157, %p158
      %p161 = scmp.ne.s32.totalorder %s146, %s160
      %p162 = scmp.eq.s32.totalorder %s31, 0
      %p163 = por %p161, %p162
      %s165 = sadd.s32 %s164, 1
      %p168 = scmp.eq.s32.totalorder %s25, 1
      %p169 = scmp.ne.s32.totalorder %s164, %s166
      %p170 = scmp.eq.s32.totalorder %s25, 0
      %p171 = por %p169, %p170
      %p172 = scmp.ne.s32.totalorder %s164, %s166
      %p173 = scmp.eq.s32.totalorder %s30, 1
      %p174 = por %p172, %p173
      %p175 = scmp.ne.s32.totalorder %s166, %s167
      %p176 = scmp.eq.s32.totalorder %s30, 0
      %p177 = por %p175, %p176
      %p178 = scmp.ne.s32.totalorder %s166, %s167
      %p179 = scmp.eq.s32.totalorder %s31, 1
      %p180 = por %p178, %p179
      %p182 = scmp.ne.s32.totalorder %s167, %s181
      %p183 = scmp.eq.s32.totalorder %s31, 0
      %p184 = por %p182, %p183
      %s186 = sadd.s32 %s185, 1
      %p189 = scmp.eq.s32.totalorder %s25, 1
      %p190 = scmp.ne.s32.totalorder %s185, %s187
      %p191 = scmp.eq.s32.totalorder %s25, 0
      %p192 = por %p190, %p191
      %p193 = scmp.ne.s32.totalorder %s185, %s187
      %p194 = scmp.eq.s32.totalorder %s30, 1
      %p195 = por %p193, %p194
      %p196 = scmp.ne.s32.totalorder %s187, %s188
      %p197 = scmp.eq.s32.totalorder %s30, 0
      %p198 = por %p196, %p197
      %p199 = scmp.ne.s32.totalorder %s187, %s188
      %p200 = scmp.eq.s32.totalorder %s31, 1
      %p201 = por %p199, %p200
      %p203 = scmp.ne.s32.totalorder %s188, %s202
      %p204 = scmp.eq.s32.totalorder %s31, 0
      %p205 = por %p203, %p204
      %s207 = sadd.s32 %s206, 1
      %p210 = scmp.eq.s32.totalorder %s25, 1
      %p211 = scmp.ne.s32.totalorder %s206, %s208
      %p212 = scmp.eq.s32.totalorder %s25, 0
      %p213 = por %p211, %p212
      %p214 = scmp.ne.s32.totalorder %s206, %s208
      %p215 = scmp.eq.s32.totalorder %s30, 1
      %p216 = por %p214, %p215
      %p217 = scmp.ne.s32.totalorder %s208, %s209
      %p218 = scmp.eq.s32.totalorder %s30, 0
      %p219 = por %p217, %p218
      %p220 = scmp.ne.s32.totalorder %s208, %s209
      %p221 = scmp.eq.s32.totalorder %s31, 1
      %p222 = por %p220, %p221
      %p224 = scmp.ne.s32.totalorder %s209, %s223
      %p225 = scmp.eq.s32.totalorder %s31, 0
      %p226 = por %p224, %p225
      %s227 = ssub.s32 %s25, %s32
      %p228 = scmp.eq.s32.totalorder %s227, 0
      %s230 = sadd.s32 %s229, 1
      %s231 = scalar_select %p228, %s229, %s230
      %p234 = pneg %p228
      %p235 = scmp.eq.s32.totalorder %s25, 1
      %p236 = por %p234, %p235
      %p237 = scmp.ne.s32.totalorder %s229, %s232
      %p238 = scmp.eq.s32.totalorder %s25, 0
      %p239 = por %p237, %p238
      %p240 = scmp.ne.s32.totalorder %s229, %s232
      %p241 = scmp.eq.s32.totalorder %s30, 1
      %p242 = por %p240, %p241
      %p243 = scmp.ne.s32.totalorder %s232, %s233
      %p244 = scmp.eq.s32.totalorder %s30, 0
      %p245 = por %p243, %p244
      %p246 = scmp.ne.s32.totalorder %s232, %s233
      %p247 = scmp.eq.s32.totalorder %s31, 1
      %p248 = por %p246, %p247
      %p250 = scmp.ne.s32.totalorder %s233, %s249
      %p251 = scmp.eq.s32.totalorder %s31, 0
      %p252 = por %p250, %p251
      %p253 = scmp.le.s32.totalorder 1, %s25
      %p254 = scmp.lt.s32.totalorder %s25, 3
      %p255 = pnand %p253, %p254
      %p256 = pneg %p255
      // Predicated region
      $region9: #{widedeep_forward.1} parent=5 // pred_check
        _
      $region10: #{widedeep_forward.1} parent=5 // pred_check_branch
        %258 = sbr.rel (%p255) target = $region12
      $region11: #{widedeep_forward.1} parent=5 // pred_region
        %s259 = ssub.s32 %s25, 1
        // Predicated region
        $region13: #{widedeep_forward.1} parent=11 // pred_check
          %p260 = pneg %p72
        $region14: #{widedeep_forward.1} parent=11 // pred_check_branch
          %262 = sbr.rel (%p260) target = $region16
        $region15: #{widedeep_forward.1} parent=11 // pred_region
          %s264 = ssub.s32 32, 32
          %265 = vsyncadd [#allocation6], %s264
          %s267 = sshll.u32 [#allocation5], 4
          %s268 = int_to_ptr.vmem [resolvable:$true] %s267
          %270 = dma.hbm_to_vmem [thread:$0]  %s1, 32, %s268, [#allocation6]
        $region16: #{widedeep_forward.1} parent=11 // pred_fallthru
          _
        // Predicated region
        $region17: #{widedeep_forward.1} parent=11 // pred_check
          %p271 = pneg %p93
        $region18: #{widedeep_forward.1} parent=11 // pred_check_branch
          %273 = sbr.rel (%p271) target = $region20
        $region19: #{widedeep_forward.1} parent=11 // pred_region
          %s275 = ssub.s32 1088, 1088
          %276 = vsyncadd [#allocation6], %s275
          %s277 = sshll.u32 [#allocation7], 4
          %s278 = int_to_ptr.vmem [resolvable:$true] %s277
          %283 = dma.hbm_to_vmem [thread:$0]  %s2, 1088, %s278, [#allocation6], 64, 64, 4
        $region20: #{widedeep_forward.1} parent=11 // pred_fallthru
          _
        // Predicated region
        $region21: #{widedeep_forward.1} parent=11 // pred_check
          %p284 = pneg %p114
        $region22: #{widedeep_forward.1} parent=11 // pred_check_branch
          %286 = sbr.rel (%p284) target = $region24
        $region23: #{widedeep_forward.1} parent=11 // pred_region
          %s288 = ssub.s32 2176, 2176
          %289 = vsyncadd [#allocation9], %s288
          %s290 = sshll.u32 [#allocation8], 4
          %s291 = int_to_ptr.vmem [resolvable:$true] %s290
          %296 = dma.hbm_to_vmem [thread:$0]  %s3, 2176, %s291, [#allocation9], 128, 128, 8
        $region24: #{widedeep_forward.1} parent=11 // pred_fallthru
          _
        // Predicated region
        $region25: #{widedeep_forward.1} parent=11 // pred_check
          %p297 = pneg %p135
        $region26: #{widedeep_forward.1} parent=11 // pred_check_branch
          %299 = sbr.rel (%p297) target = $region28
        $region27: #{widedeep_forward.1} parent=11 // pred_region
          %s301 = ssub.s32 512, 512
          %302 = vsyncadd [#allocation9], %s301
          %s303 = sshll.u32 [#allocation10], 4
          %s304 = int_to_ptr.vmem [resolvable:$true] %s303
          %309 = dma.hbm_to_vmem [thread:$0]  %s4, 512, %s304, [#allocation9], 64, 64, 4
        $region28: #{widedeep_forward.1} parent=11 // pred_fallthru
          _
        // Predicated region
        $region29: #{widedeep_forward.1} parent=11 // pred_check
          %p310 = pneg %p156
        $region30: #{widedeep_forward.1} parent=11 // pred_check_branch
          %312 = sbr.rel (%p310) target = $region32
        $region31: #{widedeep_forward.1} parent=11 // pred_region
          %s314 = ssub.s32 1024, 1024
          %315 = vsyncadd [#allocation12], %s314
          %s316 = sshll.u32 [#allocation11], 4
          %s317 = int_to_ptr.vmem [resolvable:$true] %s316
          %322 = dma.hbm_to_vmem [thread:$0]  %s5, 1024, %s317, [#allocation12], 128, 128, 8
        $region32: #{widedeep_forward.1} parent=11 // pred_fallthru
          _
        // Predicated region
        $region33: #{widedeep_forward.1} parent=11 // pred_check
          %p323 = pneg %p177
        $region34: #{widedeep_forward.1} parent=11 // pred_check_branch
          %325 = sbr.rel (%p323) target = $region36
        $region35: #{widedeep_forward.1} parent=11 // pred_region
          %s327 = ssub.s32 256, 256
          %328 = vsyncadd [#allocation12], %s327
          %s329 = sshll.u32 [#allocation13], 4
          %s330 = int_to_ptr.vmem [resolvable:$true] %s329
          %335 = dma.hbm_to_vmem [thread:$0]  %s6, 256, %s330, [#allocation12], 64, 64, 4
        $region36: #{widedeep_forward.1} parent=11 // pred_fallthru
          _
        // Predicated region
        $region37: #{widedeep_forward.1} parent=11 // pred_check
          %p336 = pneg %p198
        $region38: #{widedeep_forward.1} parent=11 // pred_check_branch
          %338 = sbr.rel (%p336) target = $region40
        $region39: #{widedeep_forward.1} parent=11 // pred_region
          %s340 = ssub.s32 512, 512
          %341 = vsyncadd [#allocation15], %s340
          %s342 = sshll.u32 [#allocation14], 4
          %s343 = int_to_ptr.vmem [resolvable:$true] %s342
          %348 = dma.hbm_to_vmem [thread:$0]  %s7, 512, %s343, [#allocation15], 128, 128, 8
        $region40: #{widedeep_forward.1} parent=11 // pred_fallthru
          _
        // Predicated region
        $region41: #{widedeep_forward.1} parent=11 // pred_check
          %p349 = pneg %p219
        $region42: #{widedeep_forward.1} parent=11 // pred_check_branch
          %351 = sbr.rel (%p349) target = $region44
        $region43: #{widedeep_forward.1} parent=11 // pred_region
          %s353 = ssub.s32 512, 512
          %354 = vsyncadd [#allocation15], %s353
          %s355 = sshll.u32 [#allocation16], 4
          %s356 = int_to_ptr.vmem [resolvable:$true] %s355
          %361 = dma.hbm_to_vmem [thread:$0]  %s8, 512, %s356, [#allocation15], 128, 128, 8
        $region44: #{widedeep_forward.1} parent=11 // pred_fallthru
          _
      $region12: #{widedeep_forward.1} parent=5 // pred_fallthru
        _
      %p362 = scmp.lt.s32.totalorder %s25, 2
      // Predicated region
      $region45: #{widedeep_forward.1} parent=5 // pred_check
        %p363 = pneg %p362
      $region46: #{widedeep_forward.1} parent=5 // pred_check_branch
        %365 = sbr.rel (%p363) target = $region48
      $region47: #{widedeep_forward.1} parent=5 // pred_region
        // Predicated region
        $region49: #{widedeep_forward.1} parent=47 // pred_check
          %p366 = pneg %p45
        $region50: #{widedeep_forward.1} parent=47 // pred_check_branch
          %368 = sbr.rel (%p366) target = $region52
        $region51: #{widedeep_forward.1} parent=47 // pred_region
          %s369 = sand.u32 %s35, 1
          %s370 = scalar_lea.sflag [#allocation3], %s369
          %s371 = sand.u32 %s35, 1
          %s372 = smul.addr %s371, 4
          %s373 = scalar_lea.vmem [#allocation2], %s372
          %s375 = ssub.s32 64, 64
          %376 = vsyncadd %s370, %s375
          %s377 = smul.addr %s25, 64
          %s378 = scalar_lea.hbm %s0, %s377
          %s380 = sshll.u32 %s373, 4
          %s381 = int_to_ptr.vmem [resolvable:$true] %s380
          %383 = dma.hbm_to_vmem [thread:$0]  %s378, 64, %s381, %s370
        $region52: #{widedeep_forward.1} parent=47 // pred_fallthru
          _
      $region48: #{widedeep_forward.1} parent=5 // pred_fallthru
        _
      %p384 = scmp.le.s32.totalorder 1, %s25
      %p385 = scmp.lt.s32.totalorder %s25, 3
      %p386 = pnand %p384, %p385
      %p387 = pneg %p386
      // Predicated region
      $region53: #{widedeep_forward.1} parent=5 // pred_check
        _
      $region54: #{widedeep_forward.1} parent=5 // pred_check_branch
        %389 = sbr.rel (%p386) target = $region56
      $region55: #{widedeep_forward.1} parent=5 // pred_region
        %s390 = ssub.s32 %s25, 1
        %s391 = sand.u32 %s38, 1
        %s392 = scalar_lea.sflag [#allocation3], %s391
        %s393 = sand.u32 %s38, 1
        %s394 = smul.addr %s393, 4
        %s395 = scalar_lea.vmem [#allocation2], %s394
        // Predicated region
        $region57: #{widedeep_forward.1} parent=55 // pred_check
          %p396 = pneg %p51
        $region58: #{widedeep_forward.1} parent=55 // pred_check_branch
          %398 = sbr.rel (%p396) target = $region60
        $region59: #{widedeep_forward.1} parent=55 // pred_region
          %399 = dma.done %s392, 64
        $region60: #{widedeep_forward.1} parent=55 // pred_fallthru
          _
        // Predicated region
        $region61: #{widedeep_forward.1} parent=55 // pred_check
          %p400 = pneg %p72
        $region62: #{widedeep_forward.1} parent=55 // pred_check_branch
          %402 = sbr.rel (%p400) target = $region64
        $region63: #{widedeep_forward.1} parent=55 // pred_region
          %403 = dma.done [#allocation6], 32
        $region64: #{widedeep_forward.1} parent=55 // pred_fallthru
          _
        // Predicated region
        $region65: #{widedeep_forward.1} parent=55 // pred_check
          %p404 = pneg %p93
        $region66: #{widedeep_forward.1} parent=55 // pred_check_branch
          %406 = sbr.rel (%p404) target = $region68
        $region67: #{widedeep_forward.1} parent=55 // pred_region
          %407 = dma.done [#allocation6], 1088
        $region68: #{widedeep_forward.1} parent=55 // pred_fallthru
          _
        // Predicated region
        $region69: #{widedeep_forward.1} parent=55 // pred_check
          %p408 = pneg %p114
        $region70: #{widedeep_forward.1} parent=55 // pred_check_branch
          %410 = sbr.rel (%p408) target = $region72
        $region71: #{widedeep_forward.1} parent=55 // pred_region
          %411 = dma.done [#allocation9], 2176
        $region72: #{widedeep_forward.1} parent=55 // pred_fallthru
          _
        // Predicated region
        $region73: #{widedeep_forward.1} parent=55 // pred_check
          %p412 = pneg %p135
        $region74: #{widedeep_forward.1} parent=55 // pred_check_branch
          %414 = sbr.rel (%p412) target = $region76
        $region75: #{widedeep_forward.1} parent=55 // pred_region
          %415 = dma.done [#allocation9], 512
        $region76: #{widedeep_forward.1} parent=55 // pred_fallthru
          _
        // Predicated region
        $region77: #{widedeep_forward.1} parent=55 // pred_check
          %p416 = pneg %p156
        $region78: #{widedeep_forward.1} parent=55 // pred_check_branch
          %418 = sbr.rel (%p416) target = $region80
        $region79: #{widedeep_forward.1} parent=55 // pred_region
          %419 = dma.done [#allocation12], 1024
        $region80: #{widedeep_forward.1} parent=55 // pred_fallthru
          _
        // Predicated region
        $region81: #{widedeep_forward.1} parent=55 // pred_check
          %p420 = pneg %p177
        $region82: #{widedeep_forward.1} parent=55 // pred_check_branch
          %422 = sbr.rel (%p420) target = $region84
        $region83: #{widedeep_forward.1} parent=55 // pred_region
          %423 = dma.done [#allocation12], 256
        $region84: #{widedeep_forward.1} parent=55 // pred_fallthru
          _
        // Predicated region
        $region85: #{widedeep_forward.1} parent=55 // pred_check
          %p424 = pneg %p198
        $region86: #{widedeep_forward.1} parent=55 // pred_check_branch
          %426 = sbr.rel (%p424) target = $region88
        $region87: #{widedeep_forward.1} parent=55 // pred_region
          %427 = dma.done [#allocation15], 512
        $region88: #{widedeep_forward.1} parent=55 // pred_fallthru
          _
        // Predicated region
        $region89: #{widedeep_forward.1} parent=55 // pred_check
          %p428 = pneg %p219
        $region90: #{widedeep_forward.1} parent=55 // pred_check_branch
          %430 = sbr.rel (%p428) target = $region92
        $region91: #{widedeep_forward.1} parent=55 // pred_region
          %431 = dma.done [#allocation15], 512
        $region92: #{widedeep_forward.1} parent=55 // pred_fallthru
          _
        %s432 = sand.u32 %s38, 1
        %s433 = scalar_lea.sflag [#allocation3], %s432
        %s434 = sand.u32 %s38, 1
        %s435 = smul.addr %s434, 4
        %s436 = scalar_lea.vmem [#allocation2], %s435
        %p437 = pneg %p51
        %p438 = pneg %p48
        %p439 = pneg %p72
        %p440 = pneg %p69
        %p441 = pneg %p93
        %p442 = pneg %p90
        %p443 = pneg %p114
        %p444 = pneg %p111
        %p445 = pneg %p135
        %p446 = pneg %p132
        %p447 = pneg %p156
        %p448 = pneg %p153
        %p449 = pneg %p177
        %p450 = pneg %p174
        %p451 = pneg %p198
        %p452 = pneg %p195
        %p453 = pneg %p219
        %p454 = pneg %p216
        %p455 = pneg %p245
        %p456 = pneg %p242
        %s457 = sand.u32 %s232, 1
        %s458 = scalar_lea.sflag [#allocation4], %s457
        %s459 = sand.u32 %s232, 1
        %s460 = scalar_lea.vmem [#allocation17], %s459
        %v462 = vld [vmem:[%s395] sm:$0xf]
        %v463 = vld [vmem:[#allocation5] sm:$0x3]
        %v464 = vlaneseq
        %v465 = vshrl.u32 %v464, 7
        %v466 = vadd.s32 %v465, 8
        %v467 = vadd.s32 %v465, 16
        %v468 = vadd.s32 %v465, 24
        %v469 = vadd.s32 %v465, 32
        %v470 = vadd.s32 %v465, 40
        %v471 = vadd.s32 %v465, 48
        %v472 = vadd.s32 %v465, 56
        %v473 = vadd.s32 %v465, 64
        %v474 = vadd.s32 %v465, 72
        %v475 = vadd.s32 %v465, 80
        %v476 = vadd.s32 %v465, 88
        %v477 = vadd.s32 %v465, 96
        %v478 = vlaneseq
        %v479 = vshrl.u32 %v478, 7
        %v480 = vsub.s32 0, %v479
        %v481 = vrot.slane %v462, %v480
        %vm482 = vcmp.eq.s32.totalorder %v465, %v481
        %vm483 = vcmp.eq.s32.totalorder %v466, %v481
        %vm484 = vcmp.eq.s32.totalorder %v467, %v481
        %vm485 = vcmp.eq.s32.totalorder %v468, %v481
        %vm486 = vcmp.eq.s32.totalorder %v469, %v481
        %vm487 = vcmp.eq.s32.totalorder %v470, %v481
        %vm488 = vcmp.eq.s32.totalorder %v471, %v481
        %vm489 = vcmp.eq.s32.totalorder %v472, %v481
        %vm490 = vcmp.eq.s32.totalorder %v473, %v481
        %vm491 = vcmp.eq.s32.totalorder %v474, %v481
        %vm492 = vcmp.eq.s32.totalorder %v475, %v481
        %vm493 = vcmp.eq.s32.totalorder %v476, %v481
        %vm494 = vcmp.eq.s32.totalorder %v477, %v481
        %v495 = vsel %vm482, 1.0, 0.0
        %v496 = vsel %vm483, 1.0, 0.0
        %v497 = vsel %vm484, 1.0, 0.0
        %v498 = vsel %vm485, 1.0, 0.0
        %v499 = vsel %vm486, 1.0, 0.0
        %v500 = vsel %vm487, 1.0, 0.0
        %v501 = vsel %vm488, 1.0, 0.0
        %v502 = vsel %vm489, 1.0, 0.0
        %v503 = vsel %vm490, 1.0, 0.0
        %v504 = vsel %vm491, 1.0, 0.0
        %v505 = vsel %vm492, 1.0, 0.0
        %v506 = vsel %vm493, 1.0, 0.0
        %v507 = vsel %vm494, 1.0, 0.0
        %v508 = vpack.c.bf16 %v496, %v495
        %v509 = vpack.c.bf16 %v498, %v497
        %v510 = vpack.c.bf16 %v500, %v499
        %v511 = vpack.c.bf16 %v502, %v501
        %v512 = vpack.c.bf16 %v504, %v503
        %v513 = vpack.c.bf16 %v506, %v505
        %v514 = vpack.c.bf16 %v507, %v507
        %vm515 = vcmask 818176
        %v517 = vsel %vm515, %v463, 0
        %vm519 = vcmask 1041408
        %v521 = vsel %vm519, %v514, 0
        %523 = vmatprep.subr.bf16.mxu0 0
        %524 = vmatpush1.bf16.msra.mxu0 %v508
        %525 = vmatprep.subr.bf16.mxu0 0
        %526 = vmatpush1.bf16.msra.mxu0 %v509
        %527 = vmatprep.subr.bf16.mxu0 0
        %528 = vmatpush1.bf16.msra.mxu0 %v510
        %529 = vmatprep.subr.bf16.mxu0 0
        %530 = vmatpush1.bf16.msra.mxu0 %v511
        %531 = vmatprep.subr.bf16.mxu0 0
        %532 = vmatpush1.bf16.msra.mxu0 %v512
        %533 = vmatprep.subr.bf16.mxu0 0
        %534 = vmatpush1.bf16.msra.mxu0 %v513
        %535 = vmatprep.subr.bf16.mxu0 0
        %536 = vmatpush1.bf16.msra.mxu0 %v521
        %537 = vmatprep.subr.bf16.mxu0 0
        %538 = vmatpush1.bf16.msra.mxu0 0
        %539 = vmatprep.subr.bf16.mxu0 0
        %540 = vmatpush1.bf16.msra.mxu0 0
        %541 = vmatprep.subr.bf16.mxu0 0
        %542 = vmatpush1.bf16.msra.mxu0 0
        %543 = vmatprep.subr.bf16.mxu0 0
        %544 = vmatpush1.bf16.msra.mxu0 0
        %545 = vmatprep.subr.bf16.mxu0 0
        %546 = vmatpush1.bf16.msra.mxu0 0
        %547 = vmatprep.subr.bf16.mxu0 0
        %548 = vmatpush1.bf16.msra.mxu0 0
        %549 = vmatprep.subr.bf16.mxu0 0
        %550 = vmatpush1.bf16.msra.mxu0 0
        %551 = vmatprep.subr.bf16.mxu0 0
        %552 = vmatpush1.bf16.msra.mxu0 0
        %553 = vmatprep.subr.bf16.mxu0 0
        %554 = vmatpush1.bf16.msra.mxu0 0
        %555 = vmatprep.mubr.bf16.mxu0 0
        %556 = vmatmul.mubr.bf16.gmra.mrb[0].mxu0 %v517
        %v557 = vpop.f32.mrb[0].mxu0
        %v558 = vadd.f32 0.0, %v557
        %v559 = vpop.f32.mrb[0].mxu0
        %v560 = vpop.f32.mrb[0].mxu0
        %v561 = vpop.f32.mrb[0].mxu0
        %562 = vdwg.mxu0
        %v563 = vlaneseq
        %v564 = vshrl.u32 %v563, 7
        %v565 = vsub.s32 1, %v564
        %v566 = vrot.slane %v462, %v565
        %vm567 = vcmp.eq.s32.totalorder %v465, %v566
        %vm568 = vcmp.eq.s32.totalorder %v466, %v566
        %vm569 = vcmp.eq.s32.totalorder %v467, %v566
        %vm570 = vcmp.eq.s32.totalorder %v468, %v566
        %vm571 = vcmp.eq.s32.totalorder %v469, %v566
        %vm572 = vcmp.eq.s32.totalorder %v470, %v566
        %vm573 = vcmp.eq.s32.totalorder %v471, %v566
        %vm574 = vcmp.eq.s32.totalorder %v472, %v566
        %vm575 = vcmp.eq.s32.totalorder %v473, %v566
        %vm576 = vcmp.eq.s32.totalorder %v474, %v566
        %vm577 = vcmp.eq.s32.totalorder %v475, %v566
        %vm578 = vcmp.eq.s32.totalorder %v476, %v566
        %vm579 = vcmp.eq.s32.totalorder %v477, %v566
        %v580 = vsel %vm567, 1.0, 0.0
        %v581 = vsel %vm568, 1.0, 0.0
        %v582 = vsel %vm569, 1.0, 0.0
        %v583 = vsel %vm570, 1.0, 0.0
        %v584 = vsel %vm571, 1.0, 0.0
        %v585 = vsel %vm572, 1.0, 0.0
        %v586 = vsel %vm573, 1.0, 0.0
        %v587 = vsel %vm574, 1.0, 0.0
        %v588 = vsel %vm575, 1.0, 0.0
        %v589 = vsel %vm576, 1.0, 0.0
        %v590 = vsel %vm577, 1.0, 0.0
        %v591 = vsel %vm578, 1.0, 0.0
        %v592 = vsel %vm579, 1.0, 0.0
        %v593 = vpack.c.bf16 %v581, %v580
        %v594 = vpack.c.bf16 %v583, %v582
        %v595 = vpack.c.bf16 %v585, %v584
        %v596 = vpack.c.bf16 %v587, %v586
        %v597 = vpack.c.bf16 %v589, %v588
        %v598 = vpack.c.bf16 %v591, %v590
        %v599 = vpack.c.bf16 %v592, %v592
        %v601 = vsel %vm519, %v599, 0
        %603 = vmatprep.subr.bf16.mxu0 0
        %604 = vmatpush1.bf16.msra.mxu0 %v593
        %605 = vmatprep.subr.bf16.mxu0 0
        %606 = vmatpush1.bf16.msra.mxu0 %v594
        %607 = vmatprep.subr.bf16.mxu0 0
        %608 = vmatpush1.bf16.msra.mxu0 %v595
        %609 = vmatprep.subr.bf16.mxu0 0
        %610 = vmatpush1.bf16.msra.mxu0 %v596
        %611 = vmatprep.subr.bf16.mxu0 0
        %612 = vmatpush1.bf16.msra.mxu0 %v597
        %613 = vmatprep.subr.bf16.mxu0 0
        %614 = vmatpush1.bf16.msra.mxu0 %v598
        %615 = vmatprep.subr.bf16.mxu0 0
        %616 = vmatpush1.bf16.msra.mxu0 %v601
        %617 = vmatprep.subr.bf16.mxu0 0
        %618 = vmatpush1.bf16.msra.mxu0 0
        %619 = vmatprep.subr.bf16.mxu0 0
        %620 = vmatpush1.bf16.msra.mxu0 0
        %621 = vmatprep.subr.bf16.mxu0 0
        %622 = vmatpush1.bf16.msra.mxu0 0
        %623 = vmatprep.subr.bf16.mxu0 0
        %624 = vmatpush1.bf16.msra.mxu0 0
        %625 = vmatprep.subr.bf16.mxu0 0
        %626 = vmatpush1.bf16.msra.mxu0 0
        %627 = vmatprep.subr.bf16.mxu0 0
        %628 = vmatpush1.bf16.msra.mxu0 0
        %629 = vmatprep.subr.bf16.mxu0 0
        %630 = vmatpush1.bf16.msra.mxu0 0
        %631 = vmatprep.subr.bf16.mxu0 0
        %632 = vmatpush1.bf16.msra.mxu0 0
        %633 = vmatprep.subr.bf16.mxu0 0
        %634 = vmatpush1.bf16.msra.mxu0 0
        %635 = vmatprep.mubr.bf16.mxu0 0
        %636 = vmatmul.mubr.bf16.gmra.mrb[0].mxu0 %v517
        %v637 = vpop.f32.mrb[0].mxu0
        %v638 = vadd.f32 0.0, %v637
        %v639 = vpop.f32.mrb[0].mxu0
        %v640 = vpop.f32.mrb[0].mxu0
        %v641 = vpop.f32.mrb[0].mxu0
        %642 = vdwg.mxu0
        %v643 = vlaneseq
        %v644 = vshrl.u32 %v643, 7
        %v645 = vsub.s32 2, %v644
        %v646 = vrot.slane %v462, %v645
        %vm647 = vcmp.eq.s32.totalorder %v465, %v646
        %vm648 = vcmp.eq.s32.totalorder %v466, %v646
        %vm649 = vcmp.eq.s32.totalorder %v467, %v646
        %vm650 = vcmp.eq.s32.totalorder %v468, %v646
        %vm651 = vcmp.eq.s32.totalorder %v469, %v646
        %vm652 = vcmp.eq.s32.totalorder %v470, %v646
        %vm653 = vcmp.eq.s32.totalorder %v471, %v646
        %vm654 = vcmp.eq.s32.totalorder %v472, %v646
        %vm655 = vcmp.eq.s32.totalorder %v473, %v646
        %vm656 = vcmp.eq.s32.totalorder %v474, %v646
        %vm657 = vcmp.eq.s32.totalorder %v475, %v646
        %vm658 = vcmp.eq.s32.totalorder %v476, %v646
        %vm659 = vcmp.eq.s32.totalorder %v477, %v646
        %v660 = vsel %vm647, 1.0, 0.0
        %v661 = vsel %vm648, 1.0, 0.0
        %v662 = vsel %vm649, 1.0, 0.0
        %v663 = vsel %vm650, 1.0, 0.0
        %v664 = vsel %vm651, 1.0, 0.0
        %v665 = vsel %vm652, 1.0, 0.0
        %v666 = vsel %vm653, 1.0, 0.0
        %v667 = vsel %vm654, 1.0, 0.0
        %v668 = vsel %vm655, 1.0, 0.0
        %v669 = vsel %vm656, 1.0, 0.0
        %v670 = vsel %vm657, 1.0, 0.0
        %v671 = vsel %vm658, 1.0, 0.0
        %v672 = vsel %vm659, 1.0, 0.0
        %v673 = vpack.c.bf16 %v661, %v660
        %v674 = vpack.c.bf16 %v663, %v662
        %v675 = vpack.c.bf16 %v665, %v664
        %v676 = vpack.c.bf16 %v667, %v666
        %v677 = vpack.c.bf16 %v669, %v668
        %v678 = vpack.c.bf16 %v671, %v670
        %v679 = vpack.c.bf16 %v672, %v672
        %v681 = vsel %vm519, %v679, 0
        %683 = vmatprep.subr.bf16.mxu0 0
        %684 = vmatpush1.bf16.msra.mxu0 %v673
        %685 = vmatprep.subr.bf16.mxu0 0
        %686 = vmatpush1.bf16.msra.mxu0 %v674
        %687 = vmatprep.subr.bf16.mxu0 0
        %688 = vmatpush1.bf16.msra.mxu0 %v675
        %689 = vmatprep.subr.bf16.mxu0 0
        %690 = vmatpush1.bf16.msra.mxu0 %v676
        %691 = vmatprep.subr.bf16.mxu0 0
        %692 = vmatpush1.bf16.msra.mxu0 %v677
        %693 = vmatprep.subr.bf16.mxu0 0
        %694 = vmatpush1.bf16.msra.mxu0 %v678
        %695 = vmatprep.subr.bf16.mxu0 0
        %696 = vmatpush1.bf16.msra.mxu0 %v681
        %697 = vmatprep.subr.bf16.mxu0 0
        %698 = vmatpush1.bf16.msra.mxu0 0
        %699 = vmatprep.subr.bf16.mxu0 0
        %700 = vmatpush1.bf16.msra.mxu0 0
        %701 = vmatprep.subr.bf16.mxu0 0
        %702 = vmatpush1.bf16.msra.mxu0 0
        %703 = vmatprep.subr.bf16.mxu0 0
        %704 = vmatpush1.bf16.msra.mxu0 0
        %705 = vmatprep.subr.bf16.mxu0 0
        %706 = vmatpush1.bf16.msra.mxu0 0
        %707 = vmatprep.subr.bf16.mxu0 0
        %708 = vmatpush1.bf16.msra.mxu0 0
        %709 = vmatprep.subr.bf16.mxu0 0
        %710 = vmatpush1.bf16.msra.mxu0 0
        %711 = vmatprep.subr.bf16.mxu0 0
        %712 = vmatpush1.bf16.msra.mxu0 0
        %713 = vmatprep.subr.bf16.mxu0 0
        %714 = vmatpush1.bf16.msra.mxu0 0
        %715 = vmatprep.mubr.bf16.mxu0 0
        %716 = vmatmul.mubr.bf16.gmra.mrb[0].mxu0 %v517
        %v717 = vpop.f32.mrb[0].mxu0
        %v718 = vadd.f32 0.0, %v717
        %v719 = vpop.f32.mrb[0].mxu0
        %v720 = vpop.f32.mrb[0].mxu0
        %v721 = vpop.f32.mrb[0].mxu0
        %722 = vdwg.mxu0
        %v723 = vlaneseq
        %v724 = vshrl.u32 %v723, 7
        %v725 = vsub.s32 3, %v724
        %v726 = vrot.slane %v462, %v725
        %vm727 = vcmp.eq.s32.totalorder %v465, %v726
        %vm728 = vcmp.eq.s32.totalorder %v466, %v726
        %vm729 = vcmp.eq.s32.totalorder %v467, %v726
        %vm730 = vcmp.eq.s32.totalorder %v468, %v726
        %vm731 = vcmp.eq.s32.totalorder %v469, %v726
        %vm732 = vcmp.eq.s32.totalorder %v470, %v726
        %vm733 = vcmp.eq.s32.totalorder %v471, %v726
        %vm734 = vcmp.eq.s32.totalorder %v472, %v726
        %vm735 = vcmp.eq.s32.totalorder %v473, %v726
        %vm736 = vcmp.eq.s32.totalorder %v474, %v726
        %vm737 = vcmp.eq.s32.totalorder %v475, %v726
        %vm738 = vcmp.eq.s32.totalorder %v476, %v726
        %vm739 = vcmp.eq.s32.totalorder %v477, %v726
        %v740 = vsel %vm727, 1.0, 0.0
        %v741 = vsel %vm728, 1.0, 0.0
        %v742 = vsel %vm729, 1.0, 0.0
        %v743 = vsel %vm730, 1.0, 0.0
        %v744 = vsel %vm731, 1.0, 0.0
        %v745 = vsel %vm732, 1.0, 0.0
        %v746 = vsel %vm733, 1.0, 0.0
        %v747 = vsel %vm734, 1.0, 0.0
        %v748 = vsel %vm735, 1.0, 0.0
        %v749 = vsel %vm736, 1.0, 0.0
        %v750 = vsel %vm737, 1.0, 0.0
        %v751 = vsel %vm738, 1.0, 0.0
        %v752 = vsel %vm739, 1.0, 0.0
        %v753 = vpack.c.bf16 %v741, %v740
        %v754 = vpack.c.bf16 %v743, %v742
        %v755 = vpack.c.bf16 %v745, %v744
        %v756 = vpack.c.bf16 %v747, %v746
        %v757 = vpack.c.bf16 %v749, %v748
        %v758 = vpack.c.bf16 %v751, %v750
        %v759 = vpack.c.bf16 %v752, %v752
        %v761 = vsel %vm519, %v759, 0
        %763 = vmatprep.subr.bf16.mxu0 0
        %764 = vmatpush1.bf16.msra.mxu0 %v753
        %765 = vmatprep.subr.bf16.mxu0 0
        %766 = vmatpush1.bf16.msra.mxu0 %v754
        %767 = vmatprep.subr.bf16.mxu0 0
        %768 = vmatpush1.bf16.msra.mxu0 %v755
        %769 = vmatprep.subr.bf16.mxu0 0
        %770 = vmatpush1.bf16.msra.mxu0 %v756
        %771 = vmatprep.subr.bf16.mxu0 0
        %772 = vmatpush1.bf16.msra.mxu0 %v757
        %773 = vmatprep.subr.bf16.mxu0 0
        %774 = vmatpush1.bf16.msra.mxu0 %v758
        %775 = vmatprep.subr.bf16.mxu0 0
        %776 = vmatpush1.bf16.msra.mxu0 %v761
        %777 = vmatprep.subr.bf16.mxu0 0
        %778 = vmatpush1.bf16.msra.mxu0 0
        %779 = vmatprep.subr.bf16.mxu0 0
        %780 = vmatpush1.bf16.msra.mxu0 0
        %781 = vmatprep.subr.bf16.mxu0 0
        %782 = vmatpush1.bf16.msra.mxu0 0
        %783 = vmatprep.subr.bf16.mxu0 0
        %784 = vmatpush1.bf16.msra.mxu0 0
        %785 = vmatprep.subr.bf16.mxu0 0
        %786 = vmatpush1.bf16.msra.mxu0 0
        %787 = vmatprep.subr.bf16.mxu0 0
        %788 = vmatpush1.bf16.msra.mxu0 0
        %789 = vmatprep.subr.bf16.mxu0 0
        %790 = vmatpush1.bf16.msra.mxu0 0
        %791 = vmatprep.subr.bf16.mxu0 0
        %792 = vmatpush1.bf16.msra.mxu0 0
        %793 = vmatprep.subr.bf16.mxu0 0
        %794 = vmatpush1.bf16.msra.mxu0 0
        %795 = vmatprep.mubr.bf16.mxu0 0
        %796 = vmatmul.mubr.bf16.gmra.mrb[0].mxu0 %v517
        %v797 = vpop.f32.mrb[0].mxu0
        %v798 = vadd.f32 0.0, %v797
        %v799 = vpop.f32.mrb[0].mxu0
        %v800 = vpop.f32.mrb[0].mxu0
        %v801 = vpop.f32.mrb[0].mxu0
        %802 = vdwg.mxu0
        %v804 = vrot.slane %v638, 4
        %v807 = vrot.slane %v798, 4
        %vm809 = vcmask 1043456
        %v810 = vsel %vm809, %v558, %v804
        %v811 = vsel %vm809, %v718, %v807
        %v812 = vpack.c.bf16 %v811, %v810
        %v813 = vld [vmem:[#allocation7] sm:$0xf]
        %v814 = vld [vmem:[#allocation7 + $0x4] sm:$0xf]
        %v815 = vld [vmem:[#allocation7 + $0x8] sm:$0xf]
        %v816 = vld [vmem:[#allocation7 + $0xc] sm:$0xf]
        %v817 = vld [vmem:[#allocation7 + $0x10] sm:$0xf]
        %v818 = vld [vmem:[#allocation7 + $0x14] sm:$0xf]
        %v819 = vld [vmem:[#allocation7 + $0x18] sm:$0xf]
        %v820 = vld [vmem:[#allocation7 + $0x1c] sm:$0xf]
        %v821 = vld [vmem:[#allocation7 + $0x20] sm:$0xf]
        %v822 = vld [vmem:[#allocation7 + $0x24] sm:$0xf]
        %v823 = vld [vmem:[#allocation7 + $0x28] sm:$0xf]
        %v824 = vld [vmem:[#allocation7 + $0x2c] sm:$0xf]
        %v825 = vld [vmem:[#allocation7 + $0x30] sm:$0xf]
        %v826 = vld [vmem:[#allocation7 + $0x34] sm:$0xf]
        %v827 = vld [vmem:[#allocation7 + $0x38] sm:$0xf]
        %v828 = vld [vmem:[#allocation7 + $0x3c] sm:$0xf]
        %v829 = vld [vmem:[#allocation7 + $0x40] sm:$0x1]
        %v830 = vld [vmem:[#allocation8] sm:$0xff]
        %v831 = vld [vmem:[#allocation8 + $0x8] sm:$0xff]
        %v832 = vld [vmem:[#allocation8 + $0x10] sm:$0xff]
        %v833 = vld [vmem:[#allocation8 + $0x18] sm:$0xff]
        %v834 = vld [vmem:[#allocation8 + $0x20] sm:$0xff]
        %v835 = vld [vmem:[#allocation8 + $0x28] sm:$0xff]
        %v836 = vld [vmem:[#allocation8 + $0x30] sm:$0xff]
        %v837 = vld [vmem:[#allocation8 + $0x38] sm:$0xff]
        %v838 = vld [vmem:[#allocation8 + $0x40] sm:$0xff]
        %v839 = vld [vmem:[#allocation8 + $0x48] sm:$0xff]
        %v840 = vld [vmem:[#allocation8 + $0x50] sm:$0xff]
        %v841 = vld [vmem:[#allocation8 + $0x58] sm:$0xff]
        %v842 = vld [vmem:[#allocation8 + $0x60] sm:$0xff]
        %v843 = vld [vmem:[#allocation8 + $0x68] sm:$0xff]
        %v844 = vld [vmem:[#allocation8 + $0x70] sm:$0xff]
        %v845 = vld [vmem:[#allocation8 + $0x78] sm:$0xff]
        %v846 = vld [vmem:[#allocation8 + $0x80] sm:$0x1]
        %848 = vset.pattern.permute.xlu0 0
        %849 = vperm.xlu0 %848, %v830
        %v850 = vpop.permute.xlu0 %849
        %853 = vset.pattern.permute.xlu0 0
        %854 = vperm.xlu0 %853, %v831
        %v855 = vpop.permute.xlu0 %854
        %858 = vset.pattern.permute.xlu0 0
        %859 = vperm.xlu0 %858, %v832
        %v860 = vpop.permute.xlu0 %859
        %863 = vset.pattern.permute.xlu0 0
        %864 = vperm.xlu0 %863, %v833
        %v865 = vpop.permute.xlu0 %864
        %868 = vset.pattern.permute.xlu0 0
        %869 = vperm.xlu0 %868, %v834
        %v870 = vpop.permute.xlu0 %869
        %873 = vset.pattern.permute.xlu0 0
        %874 = vperm.xlu0 %873, %v835
        %v875 = vpop.permute.xlu0 %874
        %878 = vset.pattern.permute.xlu0 0
        %879 = vperm.xlu0 %878, %v836
        %v880 = vpop.permute.xlu0 %879
        %883 = vset.pattern.permute.xlu0 0
        %884 = vperm.xlu0 %883, %v837
        %v885 = vpop.permute.xlu0 %884
        %888 = vset.pattern.permute.xlu0 0
        %889 = vperm.xlu0 %888, %v838
        %v890 = vpop.permute.xlu0 %889
        %893 = vset.pattern.permute.xlu0 0
        %894 = vperm.xlu0 %893, %v839
        %v895 = vpop.permute.xlu0 %894
        %898 = vset.pattern.permute.xlu0 0
        %899 = vperm.xlu0 %898, %v840
        %v900 = vpop.permute.xlu0 %899
        %903 = vset.pattern.permute.xlu0 0
        %904 = vperm.xlu0 %903, %v841
        %v905 = vpop.permute.xlu0 %904
        %908 = vset.pattern.permute.xlu0 0
        %909 = vperm.xlu0 %908, %v842
        %v910 = vpop.permute.xlu0 %909
        %913 = vset.pattern.permute.xlu0 0
        %914 = vperm.xlu0 %913, %v843
        %v915 = vpop.permute.xlu0 %914
        %918 = vset.pattern.permute.xlu0 0
        %919 = vperm.xlu0 %918, %v844
        %v920 = vpop.permute.xlu0 %919
        %923 = vset.pattern.permute.xlu0 0
        %924 = vperm.xlu0 %923, %v845
        %v925 = vpop.permute.xlu0 %924
        %928 = vset.pattern.permute.xlu0 0
        %929 = vperm.xlu0 %928, %v846
        %v930 = vpop.permute.xlu0 %929
        %v949 = vunpack.c.l.b16 %v813
        %v950 = vunpack.c.l.b16 %v814
        %v951 = vunpack.c.l.b16 %v815
        %v952 = vunpack.c.l.b16 %v816
        %v953 = vunpack.c.l.b16 %v817
        %v954 = vunpack.c.l.b16 %v818
        %v955 = vunpack.c.l.b16 %v819
        %v956 = vunpack.c.l.b16 %v820
        %v957 = vunpack.c.l.b16 %v821
        %v958 = vunpack.c.l.b16 %v822
        %v959 = vunpack.c.l.b16 %v823
        %v960 = vunpack.c.l.b16 %v824
        %v961 = vunpack.c.l.b16 %v825
        %v962 = vunpack.c.l.b16 %v826
        %v963 = vunpack.c.l.b16 %v827
        %v964 = vunpack.c.l.b16 %v828
        %v965 = vunpack.c.l.b16 %v829
        %v966 = vpack.c.b16 %v950, %v949
        %v967 = vpack.c.b16 %v952, %v951
        %v968 = vpack.c.b16 %v954, %v953
        %v969 = vpack.c.b16 %v956, %v955
        %v970 = vpack.c.b16 %v958, %v957
        %v971 = vpack.c.b16 %v960, %v959
        %v972 = vpack.c.b16 %v962, %v961
        %v973 = vpack.c.b16 %v964, %v963
        %v974 = vpack.c.b16 %v965, %v965
        %vm975 = vcmask 130048
        %v977 = vsel %vm975, %v966, 0
        %v980 = vsel %vm975, %v967, 0
        %v983 = vsel %vm975, %v968, 0
        %v986 = vsel %vm975, %v969, 0
        %v989 = vsel %vm975, %v970, 0
        %v992 = vsel %vm975, %v971, 0
        %v995 = vsel %vm975, %v972, 0
        %v998 = vsel %vm975, %v973, 0
        %v1001 = vsel %vm975, %v974, 0
        %1003 = vmatprep.subr.bf16.mxu0 0
        %1004 = vmatpush1.bf16.msra.mxu0 %v812
        %1005 = vmatprep.subr.bf16.mxu0 0
        %1006 = vmatpush1.bf16.msra.mxu0 0
        %1007 = vmatprep.subr.bf16.mxu0 0
        %1008 = vmatpush1.bf16.msra.mxu0 0
        %1009 = vmatprep.subr.bf16.mxu0 0
        %1010 = vmatpush1.bf16.msra.mxu0 0
        %1011 = vmatprep.subr.bf16.mxu0 0
        %1012 = vmatpush1.bf16.msra.mxu0 0
        %1013 = vmatprep.subr.bf16.mxu0 0
        %1014 = vmatpush1.bf16.msra.mxu0 0
        %1015 = vmatprep.subr.bf16.mxu0 0
        %1016 = vmatpush1.bf16.msra.mxu0 0
        %1017 = vmatprep.subr.bf16.mxu0 0
        %1018 = vmatpush1.bf16.msra.mxu0 0
        %1019 = vmatprep.subr.bf16.mxu0 0
        %1020 = vmatpush1.bf16.msra.mxu0 0
        %1021 = vmatprep.subr.bf16.mxu0 0
        %1022 = vmatpush1.bf16.msra.mxu0 0
        %1023 = vmatprep.subr.bf16.mxu0 0
        %1024 = vmatpush1.bf16.msra.mxu0 0
        %1025 = vmatprep.subr.bf16.mxu0 0
        %1026 = vmatpush1.bf16.msra.mxu0 0
        %1027 = vmatprep.subr.bf16.mxu0 0
        %1028 = vmatpush1.bf16.msra.mxu0 0
        %1029 = vmatprep.subr.bf16.mxu0 0
        %1030 = vmatpush1.bf16.msra.mxu0 0
        %1031 = vmatprep.subr.bf16.mxu0 0
        %1032 = vmatpush1.bf16.msra.mxu0 0
        %1033 = vmatprep.subr.bf16.mxu0 0
        %1034 = vmatpush1.bf16.msra.mxu0 0
        %1035 = vmatprep.mubr.bf16.mxu0 0
        %1036 = vmatmul.mubr.bf16.gmra.mrb[0].mxu0 %v977
        %v1037 = vpop.f32.mrb[0].mxu0
        %v1038 = vadd.f32 %v850, %v1037
        %v1039 = vpop.f32.mrb[0].mxu0
        %v1040 = vpop.f32.mrb[0].mxu0
        %v1041 = vadd.f32 %v855, %v1040
        %v1042 = vpop.f32.mrb[0].mxu0
        %1043 = vmatprep.mubr.bf16.mxu0 0
        %1044 = vmatmul.mubr.bf16.gmra.mrb[0].mxu0 %v980
        %v1045 = vpop.f32.mrb[0].mxu0
        %v1046 = vadd.f32 %v860, %v1045
        %v1047 = vpop.f32.mrb[0].mxu0
        %v1048 = vpop.f32.mrb[0].mxu0
        %v1049 = vadd.f32 %v865, %v1048
        %v1050 = vpop.f32.mrb[0].mxu0
        %1051 = vmatprep.mubr.bf16.mxu0 0
        %1052 = vmatmul.mubr.bf16.gmra.mrb[0].mxu0 %v983
        %v1053 = vpop.f32.mrb[0].mxu0
        %v1054 = vadd.f32 %v870, %v1053
        %v1055 = vpop.f32.mrb[0].mxu0
        %v1056 = vpop.f32.mrb[0].mxu0
        %v1057 = vadd.f32 %v875, %v1056
        %v1058 = vpop.f32.mrb[0].mxu0
        %1059 = vmatprep.mubr.bf16.mxu0 0
        %1060 = vmatmul.mubr.bf16.gmra.mrb[0].mxu0 %v986
        %v1061 = vpop.f32.mrb[0].mxu0
        %v1062 = vadd.f32 %v880, %v1061
        %v1063 = vpop.f32.mrb[0].mxu0
        %v1064 = vpop.f32.mrb[0].mxu0
        %v1065 = vadd.f32 %v885, %v1064
        %v1066 = vpop.f32.mrb[0].mxu0
        %1067 = vmatprep.mubr.bf16.mxu0 0
        %1068 = vmatmul.mubr.bf16.gmra.mrb[0].mxu0 %v989
        %v1069 = vpop.f32.mrb[0].mxu0
        %v1070 = vadd.f32 %v890, %v1069
        %v1071 = vpop.f32.mrb[0].mxu0
        %v1072 = vpop.f32.mrb[0].mxu0
        %v1073 = vadd.f32 %v895, %v1072
        %v1074 = vpop.f32.mrb[0].mxu0
        %1075 = vmatprep.mubr.bf16.mxu0 0
        %1076 = vmatmul.mubr.bf16.gmra.mrb[0].mxu0 %v992
        %v1077 = vpop.f32.mrb[0].mxu0
        %v1078 = vadd.f32 %v900, %v1077
        %v1079 = vpop.f32.mrb[0].mxu0
        %v1080 = vpop.f32.mrb[0].mxu0
        %v1081 = vadd.f32 %v905, %v1080
        %v1082 = vpop.f32.mrb[0].mxu0
        %1083 = vmatprep.mubr.bf16.mxu0 0
        %1084 = vmatmul.mubr.bf16.gmra.mrb[0].mxu0 %v995
        %v1085 = vpop.f32.mrb[0].mxu0
        %v1086 = vadd.f32 %v910, %v1085
        %v1087 = vpop.f32.mrb[0].mxu0
        %v1088 = vpop.f32.mrb[0].mxu0
        %v1089 = vadd.f32 %v915, %v1088
        %v1090 = vpop.f32.mrb[0].mxu0
        %1091 = vmatprep.mubr.bf16.mxu0 0
        %1092 = vmatmul.mubr.bf16.gmra.mrb[0].mxu0 %v998
        %v1093 = vpop.f32.mrb[0].mxu0
        %v1094 = vadd.f32 %v920, %v1093
        %v1095 = vpop.f32.mrb[0].mxu0
        %v1096 = vpop.f32.mrb[0].mxu0
        %v1097 = vadd.f32 %v925, %v1096
        %v1098 = vpop.f32.mrb[0].mxu0
        %1099 = vmatprep.mubr.bf16.mxu0 0
        %1100 = vmatmul.mubr.bf16.gmra.mrb[0].mxu0 %v1001
        %v1101 = vpop.f32.mrb[0].mxu0
        %v1102 = vadd.f32 %v930, %v1101
        %v1103 = vpop.f32.mrb[0].mxu0
        %v1104 = vpop.f32.mrb[0].mxu0
        %v1105 = vpop.f32.mrb[0].mxu0
        %1106 = vdwg.mxu0
        %v1107 = vmax.f32 %v1038, 0.0
        %v1108 = vmax.f32 %v1041, 0.0
        %v1109 = vmax.f32 %v1046, 0.0
        %v1110 = vmax.f32 %v1049, 0.0
        %v1111 = vmax.f32 %v1054, 0.0
        %v1112 = vmax.f32 %v1057, 0.0
        %v1113 = vmax.f32 %v1062, 0.0
        %v1114 = vmax.f32 %v1065, 0.0
        %v1115 = vmax.f32 %v1070, 0.0
        %v1116 = vmax.f32 %v1073, 0.0
        %v1117 = vmax.f32 %v1078, 0.0
        %v1118 = vmax.f32 %v1081, 0.0
        %v1119 = vmax.f32 %v1086, 0.0
        %v1120 = vmax.f32 %v1089, 0.0
        %v1121 = vmax.f32 %v1094, 0.0
        %v1122 = vmax.f32 %v1097, 0.0
        %v1123 = vpack.c.bf16 %v1108, %v1107
        %v1124 = vpack.c.bf16 %v1110, %v1109
        %v1125 = vpack.c.bf16 %v1112, %v1111
        %v1126 = vpack.c.bf16 %v1114, %v1113
        %v1127 = vpack.c.bf16 %v1116, %v1115
        %v1128 = vpack.c.bf16 %v1118, %v1117
        %v1129 = vpack.c.bf16 %v1120, %v1119
        %v1130 = vpack.c.bf16 %v1122, %v1121
        %v1131 = vld [vmem:[#allocation10] sm:$0xf]
        %v1132 = vld [vmem:[#allocation10 + $0x4] sm:$0xf]
        %v1133 = vld [vmem:[#allocation10 + $0x8] sm:$0xf]
        %v1134 = vld [vmem:[#allocation10 + $0xc] sm:$0xf]
        %v1135 = vld [vmem:[#allocation10 + $0x10] sm:$0xf]
        %v1136 = vld [vmem:[#allocation10 + $0x14] sm:$0xf]
        %v1137 = vld [vmem:[#allocation10 + $0x18] sm:$0xf]
        %v1138 = vld [vmem:[#allocation10 + $0x1c] sm:$0xf]
        %v1139 = vld [vmem:[#allocation11] sm:$0xff]
        %v1140 = vld [vmem:[#allocation11 + $0x8] sm:$0xff]
        %v1141 = vld [vmem:[#allocation11 + $0x10] sm:$0xff]
        %v1142 = vld [vmem:[#allocation11 + $0x18] sm:$0xff]
        %v1143 = vld [vmem:[#allocation11 + $0x20] sm:$0xff]
        %v1144 = vld [vmem:[#allocation11 + $0x28] sm:$0xff]
        %v1145 = vld [vmem:[#allocation11 + $0x30] sm:$0xff]
        %v1146 = vld [vmem:[#allocation11 + $0x38] sm:$0xff]
        %1148 = vset.pattern.permute.xlu0 0
        %1149 = vperm.xlu0 %1148, %v1139
        %v1150 = vpop.permute.xlu0 %1149
        %1153 = vset.pattern.permute.xlu0 0
        %1154 = vperm.xlu0 %1153, %v1140
        %v1155 = vpop.permute.xlu0 %1154
        %1158 = vset.pattern.permute.xlu0 0
        %1159 = vperm.xlu0 %1158, %v1141
        %v1160 = vpop.permute.xlu0 %1159
        %1163 = vset.pattern.permute.xlu0 0
        %1164 = vperm.xlu0 %1163, %v1142
        %v1165 = vpop.permute.xlu0 %1164
        %1168 = vset.pattern.permute.xlu0 0
        %1169 = vperm.xlu0 %1168, %v1143
        %v1170 = vpop.permute.xlu0 %1169
        %1173 = vset.pattern.permute.xlu0 0
        %1174 = vperm.xlu0 %1173, %v1144
        %v1175 = vpop.permute.xlu0 %1174
        %1178 = vset.pattern.permute.xlu0 0
        %1179 = vperm.xlu0 %1178, %v1145
        %v1180 = vpop.permute.xlu0 %1179
        %1183 = vset.pattern.permute.xlu0 0
        %1184 = vperm.xlu0 %1183, %v1146
        %v1185 = vpop.permute.xlu0 %1184
        %v1195 = vunpack.c.l.b16 %v1131
        %v1196 = vunpack.c.l.b16 %v1132
        %v1197 = vunpack.c.l.b16 %v1133
        %v1198 = vunpack.c.l.b16 %v1134
        %v1199 = vunpack.c.l.b16 %v1135
        %v1200 = vunpack.c.l.b16 %v1136
        %v1201 = vunpack.c.l.b16 %v1137
        %v1202 = vunpack.c.l.b16 %v1138
        %v1203 = vpack.c.b16 %v1196, %v1195
        %v1204 = vpack.c.b16 %v1198, %v1197
        %v1205 = vpack.c.b16 %v1200, %v1199
        %v1206 = vpack.c.b16 %v1202, %v1201
        %1211 = vmatprep.subr.bf16.mxu0 0
        %1212 = vmatpush1.bf16.msra.mxu0 %v1123
        %1213 = vmatprep.subr.bf16.mxu0 0
        %1214 = vmatpush1.bf16.msra.mxu0 %v1124
        %1215 = vmatprep.subr.bf16.mxu0 0
        %1216 = vmatpush1.bf16.msra.mxu0 %v1125
        %1217 = vmatprep.subr.bf16.mxu0 0
        %1218 = vmatpush1.bf16.msra.mxu0 %v1126
        %1219 = vmatprep.subr.bf16.mxu0 0
        %1220 = vmatpush1.bf16.msra.mxu0 %v1127
        %1221 = vmatprep.subr.bf16.mxu0 0
        %1222 = vmatpush1.bf16.msra.mxu0 %v1128
        %1223 = vmatprep.subr.bf16.mxu0 0
        %1224 = vmatpush1.bf16.msra.mxu0 %v1129
        %1225 = vmatprep.subr.bf16.mxu0 0
        %1226 = vmatpush1.bf16.msra.mxu0 %v1130
        %1227 = vmatprep.subr.bf16.mxu0 0
        %1228 = vmatpush1.bf16.msra.mxu0 0
        %1229 = vmatprep.subr.bf16.mxu0 0
        %1230 = vmatpush1.bf16.msra.mxu0 0
        %1231 = vmatprep.subr.bf16.mxu0 0
        %1232 = vmatpush1.bf16.msra.mxu0 0
        %1233 = vmatprep.subr.bf16.mxu0 0
        %1234 = vmatpush1.bf16.msra.mxu0 0
        %1235 = vmatprep.subr.bf16.mxu0 0
        %1236 = vmatpush1.bf16.msra.mxu0 0
        %1237 = vmatprep.subr.bf16.mxu0 0
        %1238 = vmatpush1.bf16.msra.mxu0 0
        %1239 = vmatprep.subr.bf16.mxu0 0
        %1240 = vmatpush1.bf16.msra.mxu0 0
        %1241 = vmatprep.subr.bf16.mxu0 0
        %1242 = vmatpush1.bf16.msra.mxu0 0
        %1243 = vmatprep.mubr.bf16.mxu0 0
        %1244 = vmatmul.mubr.bf16.gmra.mrb[0].mxu0 %v1203
        %v1245 = vpop.f32.mrb[0].mxu0
        %v1246 = vadd.f32 %v1150, %v1245
        %v1247 = vpop.f32.mrb[0].mxu0
        %v1248 = vpop.f32.mrb[0].mxu0
        %v1249 = vadd.f32 %v1155, %v1248
        %v1250 = vpop.f32.mrb[0].mxu0
        %1251 = vmatprep.mubr.bf16.mxu0 0
        %1252 = vmatmul.mubr.bf16.gmra.mrb[0].mxu0 %v1204
        %v1253 = vpop.f32.mrb[0].mxu0
        %v1254 = vadd.f32 %v1160, %v1253
        %v1255 = vpop.f32.mrb[0].mxu0
        %v1256 = vpop.f32.mrb[0].mxu0
        %v1257 = vadd.f32 %v1165, %v1256
        %v1258 = vpop.f32.mrb[0].mxu0
        %1259 = vmatprep.mubr.bf16.mxu0 0
        %1260 = vmatmul.mubr.bf16.gmra.mrb[0].mxu0 %v1205
        %v1261 = vpop.f32.mrb[0].mxu0
        %v1262 = vadd.f32 %v1170, %v1261
        %v1263 = vpop.f32.mrb[0].mxu0
        %v1264 = vpop.f32.mrb[0].mxu0
        %v1265 = vadd.f32 %v1175, %v1264
        %v1266 = vpop.f32.mrb[0].mxu0
        %1267 = vmatprep.mubr.bf16.mxu0 0
        %1268 = vmatmul.mubr.bf16.gmra.mrb[0].mxu0 %v1206
        %v1269 = vpop.f32.mrb[0].mxu0
        %v1270 = vadd.f32 %v1180, %v1269
        %v1271 = vpop.f32.mrb[0].mxu0
        %v1272 = vpop.f32.mrb[0].mxu0
        %v1273 = vadd.f32 %v1185, %v1272
        %v1274 = vpop.f32.mrb[0].mxu0
        %1275 = vdwg.mxu0
        %v1276 = vmax.f32 %v1246, 0.0
        %v1277 = vmax.f32 %v1249, 0.0
        %v1278 = vmax.f32 %v1254, 0.0
        %v1279 = vmax.f32 %v1257, 0.0
        %v1280 = vmax.f32 %v1262, 0.0
        %v1281 = vmax.f32 %v1265, 0.0
        %v1282 = vmax.f32 %v1270, 0.0
        %v1283 = vmax.f32 %v1273, 0.0
        %v1284 = vpack.c.bf16 %v1277, %v1276
        %v1285 = vpack.c.bf16 %v1279, %v1278
        %v1286 = vpack.c.bf16 %v1281, %v1280
        %v1287 = vpack.c.bf16 %v1283, %v1282
        %v1288 = vld [vmem:[#allocation13] sm:$0xf]
        %v1289 = vld [vmem:[#allocation13 + $0x4] sm:$0xf]
        %v1290 = vld [vmem:[#allocation13 + $0x8] sm:$0xf]
        %v1291 = vld [vmem:[#allocation13 + $0xc] sm:$0xf]
        %v1292 = vld [vmem:[#allocation14] sm:$0xff]
        %v1293 = vld [vmem:[#allocation14 + $0x8] sm:$0xff]
        %v1294 = vld [vmem:[#allocation14 + $0x10] sm:$0xff]
        %v1295 = vld [vmem:[#allocation14 + $0x18] sm:$0xff]
        %1297 = vset.pattern.permute.xlu0 0
        %1298 = vperm.xlu0 %1297, %v1292
        %v1299 = vpop.permute.xlu0 %1298
        %1302 = vset.pattern.permute.xlu0 0
        %1303 = vperm.xlu0 %1302, %v1293
        %v1304 = vpop.permute.xlu0 %1303
        %1307 = vset.pattern.permute.xlu0 0
        %1308 = vperm.xlu0 %1307, %v1294
        %v1309 = vpop.permute.xlu0 %1308
        %1312 = vset.pattern.permute.xlu0 0
        %1313 = vperm.xlu0 %1312, %v1295
        %v1314 = vpop.permute.xlu0 %1313
        %v1320 = vunpack.c.l.b16 %v1288
        %v1321 = vunpack.c.l.b16 %v1289
        %v1322 = vunpack.c.l.b16 %v1290
        %v1323 = vunpack.c.l.b16 %v1291
        %v1324 = vpack.c.b16 %v1321, %v1320
        %v1325 = vpack.c.b16 %v1323, %v1322
        %vm1326 = vcmask 523264
        %v1328 = vsel %vm1326, %v1324, 0
        %v1331 = vsel %vm1326, %v1325, 0
        %1333 = vmatprep.subr.bf16.mxu0 0
        %1334 = vmatpush1.bf16.msra.mxu0 %v1284
        %1335 = vmatprep.subr.bf16.mxu0 0
        %1336 = vmatpush1.bf16.msra.mxu0 %v1285
        %1337 = vmatprep.subr.bf16.mxu0 0
        %1338 = vmatpush1.bf16.msra.mxu0 %v1286
        %1339 = vmatprep.subr.bf16.mxu0 0
        %1340 = vmatpush1.bf16.msra.mxu0 %v1287
        %1341 = vmatprep.subr.bf16.mxu0 0
        %1342 = vmatpush1.bf16.msra.mxu0 0
        %1343 = vmatprep.subr.bf16.mxu0 0
        %1344 = vmatpush1.bf16.msra.mxu0 0
        %1345 = vmatprep.subr.bf16.mxu0 0
        %1346 = vmatpush1.bf16.msra.mxu0 0
        %1347 = vmatprep.subr.bf16.mxu0 0
        %1348 = vmatpush1.bf16.msra.mxu0 0
        %1349 = vmatprep.subr.bf16.mxu0 0
        %1350 = vmatpush1.bf16.msra.mxu0 0
        %1351 = vmatprep.subr.bf16.mxu0 0
        %1352 = vmatpush1.bf16.msra.mxu0 0
        %1353 = vmatprep.subr.bf16.mxu0 0
        %1354 = vmatpush1.bf16.msra.mxu0 0
        %1355 = vmatprep.subr.bf16.mxu0 0
        %1356 = vmatpush1.bf16.msra.mxu0 0
        %1357 = vmatprep.subr.bf16.mxu0 0
        %1358 = vmatpush1.bf16.msra.mxu0 0
        %1359 = vmatprep.subr.bf16.mxu0 0
        %1360 = vmatpush1.bf16.msra.mxu0 0
        %1361 = vmatprep.subr.bf16.mxu0 0
        %1362 = vmatpush1.bf16.msra.mxu0 0
        %1363 = vmatprep.subr.bf16.mxu0 0
        %1364 = vmatpush1.bf16.msra.mxu0 0
        %1365 = vmatprep.mubr.bf16.mxu0 0
        %1366 = vmatmul.mubr.bf16.gmra.mrb[0].mxu0 %v1328
        %v1367 = vpop.f32.mrb[0].mxu0
        %v1368 = vadd.f32 %v1299, %v1367
        %v1369 = vpop.f32.mrb[0].mxu0
        %v1370 = vpop.f32.mrb[0].mxu0
        %v1371 = vadd.f32 %v1304, %v1370
        %v1372 = vpop.f32.mrb[0].mxu0
        %1373 = vmatprep.mubr.bf16.mxu0 0
        %1374 = vmatmul.mubr.bf16.gmra.mrb[0].mxu0 %v1331
        %v1375 = vpop.f32.mrb[0].mxu0
        %v1376 = vadd.f32 %v1309, %v1375
        %v1377 = vpop.f32.mrb[0].mxu0
        %v1378 = vpop.f32.mrb[0].mxu0
        %v1379 = vadd.f32 %v1314, %v1378
        %v1380 = vpop.f32.mrb[0].mxu0
        %1381 = vdwg.mxu0
        %v1382 = vmax.f32 %v1368, 0.0
        %v1383 = vmax.f32 %v1371, 0.0
        %v1384 = vmax.f32 %v1376, 0.0
        %v1385 = vmax.f32 %v1379, 0.0
        %v1386 = vld [vmem:[#allocation16] sm:$0xff]
        %v1387 = vld [vmem:[#allocation16 + $0x8] sm:$0xff]
        %v1388 = vld [vmem:[#allocation16 + $0x10] sm:$0xff]
        %v1389 = vld [vmem:[#allocation16 + $0x18] sm:$0xff]
        %1391 = vset.pattern.permute.xlu0 0
        %1392 = vperm.xlu0 %1391, %v1386
        %v1393 = vpop.permute.xlu0 %1392
        %1396 = vset.pattern.permute.xlu0 0
        %1397 = vperm.xlu0 %1396, %v1387
        %v1398 = vpop.permute.xlu0 %1397
        %1401 = vset.pattern.permute.xlu0 0
        %1402 = vperm.xlu0 %1401, %v1388
        %v1403 = vpop.permute.xlu0 %1402
        %1406 = vset.pattern.permute.xlu0 0
        %1407 = vperm.xlu0 %1406, %v1389
        %v1408 = vpop.permute.xlu0 %1407
        %v1410 = vmul.f32 %v1382, %v1393
        %v1411 = vmul.f32 %v1383, %v1398
        %v1412 = vmul.f32 %v1384, %v1403
        %v1413 = vmul.f32 %v1385, %v1408
        %v1414 = vadd.f32 %v1410, %v1411
        %v1415 = vadd.f32 %v1414, %v1412
        %v1416 = vadd.f32 %v1415, %v1413
        %v1417 = vrot.slane %v1416, 4
        %v1418 = vadd.f32 %v1416, %v1417
        %v1419 = vrot.slane %v1418, 2
        %v1420 = vadd.f32 %v1418, %v1419
        %v1421 = vrot.slane %v1420, 1
        %v1422 = vadd.f32 %v1420, %v1421
        %v1423 = vadd.f32 %v1102, %v1422
        %v1424 = vsub.f32 0.0, %v1423
        %v1425 = vmul.f32 %v1424, 1.442695
        %v1426 = vpow.pop %v1425
        %v1427 = vadd.f32 %v1426, 1.0
        %v1428 = vrcp.pop %v1427
        %1429 = vst [vmem:[%s460] sm:$0x1] %v1428
        %s1430 = sand.u32 %s232, 1
        %s1431 = scalar_lea.sflag [#allocation4], %s1430
        %s1432 = sand.u32 %s232, 1
        %s1433 = scalar_lea.vmem [#allocation17], %s1432
        // Predicated region
        $region93: #{widedeep_forward.1} parent=55 // pred_check
          %p1434 = pneg %p242
        $region94: #{widedeep_forward.1} parent=55 // pred_check_branch
          %1436 = sbr.rel (%p1434) target = $region96
        $region95: #{widedeep_forward.1} parent=55 // pred_region
          %s1438 = ssub.s32 16, 16
          %1439 = vsyncadd %s1431, %s1438
          %s1440 = smul.addr %s30, 16
          %s1441 = scalar_lea.hbm %s9, %s1440
          %s1443 = sshll.u32 %s1433, 4
          %s1444 = int_to_ptr.vmem [resolvable:$true] %s1443
          %1446 = dma.vmem_to_hbm [thread:$0]  %s1444, 16, %s1441, %s1431
        $region96: #{widedeep_forward.1} parent=55 // pred_fallthru
          _
      $region56: #{widedeep_forward.1} parent=5 // pred_fallthru
        _
      %p1447 = scmp.le.s32.totalorder 2, %s25
      // Predicated region
      $region97: #{widedeep_forward.1} parent=5 // pred_check
        %p1448 = pneg %p1447
      $region98: #{widedeep_forward.1} parent=5 // pred_check_branch
        %1450 = sbr.rel (%p1448) target = $region100
      $region99: #{widedeep_forward.1} parent=5 // pred_region
        %s1451 = ssub.s32 %s25, 2
        // Predicated region
        $region101: #{widedeep_forward.1} parent=99 // pred_check
          %p1452 = pneg %p248
        $region102: #{widedeep_forward.1} parent=99 // pred_check_branch
          %1454 = sbr.rel (%p1452) target = $region104
        $region103: #{widedeep_forward.1} parent=99 // pred_region
          %s1455 = sand.u32 %s233, 1
          %s1456 = scalar_lea.sflag [#allocation4], %s1455
          %s1457 = sand.u32 %s233, 1
          %s1458 = scalar_lea.vmem [#allocation17], %s1457
          %1459 = dma.done %s1456, 16
        $region104: #{widedeep_forward.1} parent=99 // pred_fallthru
          _
      $region100: #{widedeep_forward.1} parent=5 // pred_fallthru
        _
    $region6: #{widedeep_forward.1} parent=1 // loop_footer
      %s29 = sadd.s32 1, %s25
    $region7: #{widedeep_forward.1} parent=1 // loop_footer_branch
      %24 = sbr.rel target = $region3
    $region8: #{widedeep_forward.1} parent=1 // loop_exit
      _
    %1460 = vsyncpa [#allocation3], 1
    %s1461 = scalar_lea.sflag [#allocation3], 1
    %1462 = vsyncpa %s1461, 1
    %1463 = vsyncpa [#allocation6], 1
    %1464 = vsyncpa [#allocation9], 1
    %1465 = vsyncpa [#allocation12], 1
    %1466 = vsyncpa [#allocation15], 1
    %1467 = vsyncpa [#allocation4], 1
    %s1468 = scalar_lea.sflag [#allocation4], 1
    %1469 = vsyncpa %s1468, 1

</llo_original>
